<compile_context>
chip_gen: v7x
topology: tpu7x:2x2x1
jax: 0.10.0
libtpu: 0.0.40
codegen_flags: <defaults>
</compile_context>

<pallas_src>
import functools
import math

import jax
import jax.numpy as jnp
from jax.experimental import pallas as pl
from jax.experimental.pallas import tpu as pltpu


def _round_up(x, m):
    return (x + m - 1) // m * m


def _pad2(a, rows, cols):
    pr, pc = rows - a.shape[0], cols - a.shape[1]
    if pr == 0 and pc == 0:
        return a  # no-op: avoid an extra HBM pass
    return jnp.pad(a, ((0, pr), (0, pc)))


def _vmem_capacity_bytes():
    """Physical VMEM of the current generation; fall back to the smallest (v7x)."""
    try:
        return int(pltpu.get_tpu_info().vmem_capacity_bytes)
    except Exception:
        return 64 * 1024 * 1024


def _choose_tile(n8, cap):
    """Pick a row tile (multiple of 8) <= cap, preferring one that divides n8.

    Returns (tile, n_pad). Keeps >=2 grid steps when the batch allows it so
    both v7x TensorCores get work; only pads rows beyond the 8-row alignment
    when an exactly-dividing tile would be too small.
    """
    cap = max(8, min(cap, n8))
    if n8 >= 16:
        cap = min(cap, _round_up(n8 // 2, 8))   # >=2 grid steps
    cap8 = max(8, cap - cap % 8)
    best = 8
    for t in range(cap8, 7, -8):
        if n8 % t == 0:
            best = t
            break
    if best >= max(cap8 // 2, min(cap8, 128)):
        return best, n8                          # no row padding, no output slice
    return cap8, _round_up(n8, cap8)             # pad rows, keep big tiles


def _resnet_block_kernel(*refs, has_shortcut: bool, final_nl: bool, compute_dtype):
    if has_shortcut:
        x_ref, w0_ref, b0_ref, w1_ref, b1_ref, ws_ref, o_ref = refs
    else:
        x_ref, w0_ref, b0_ref, w1_ref, b1_ref, o_ref = refs
        ws_ref = None

    x = x_ref[...]

    # net = fc_0(relu(x))   (f32 accumulation on the MXU)
    h0 = jnp.maximum(x, 0).astype(compute_dtype)
    net = jnp.dot(h0, w0_ref[...], preferred_element_type=jnp.float32)
    net = net + b0_ref[...].astype(jnp.float32)

    # dx = fc_1(relu(net))
    h1 = jnp.maximum(net, 0.0).astype(compute_dtype)
    dx = jnp.dot(h1, w1_ref[...], preferred_element_type=jnp.float32)
    dx = dx + b1_ref[...].astype(jnp.float32)

    # shortcut
    if has_shortcut:
        x_s = jnp.dot(x.astype(compute_dtype), ws_ref[...],
                      preferred_element_type=jnp.float32)
    else:
        x_s = x.astype(jnp.float32)

    out = x_s + dx
    if final_nl:
        out = jnp.maximum(out, 0.2 * out)   # leaky_relu(0.2)

    o_ref[...] = out.astype(o_ref.dtype)


def resnet_block_fc(x, params, *, final_nl=False, tile_n=1024,
                    compute_dtype=None, vmem_fraction=0.7):
    """ResnetBlockFC forward.

    x: [..., size_in] float array.
    params: dict with
       w0: [size_in, size_h]   b0: [1, size_h] (or [size_h])
       w1: [size_h, size_out]  b1: [1, size_out] (or [size_out])
       ws: [size_in, size_out] or None (identity shortcut, size_in == size_out)
    compute_dtype: optional MXU operand dtype (e.g. jnp.bfloat16 to speed up
       f32 inputs at reduced precision). Default: x.dtype (exact path).
    """
    w0, b0, w1, b1 = params["w0"], params["b0"], params["w1"], params["b1"]
    ws = params.get("ws", None)
    size_in, size_h = w0.shape
    size_out = w1.shape[1]
    has_shortcut = ws is not None
    if not has_shortcut:
        assert size_in == size_out, "identity shortcut requires size_in == size_out"

    if compute_dtype is None:
        compute_dtype = x.dtype
    w0 = w0.astype(compute_dtype)
    w1 = w1.astype(compute_dtype)
    if has_shortcut:
        ws = ws.astype(compute_dtype)

    # ---- lane-dense feature padding (multiples of 128) ----
    in_p = _round_up(size_in, 128)
    h_p = _round_up(size_h, 128)
    out_p = _round_up(size_out, 128)

    # ---- flatten leading dims to a row axis ----
    lead_shape = x.shape[:-1]
    n = math.prod(lead_shape) if lead_shape else 1
    x2 = x.reshape(n, size_in)
    n8 = _round_up(max(n, 1), 8)

    # ---- VMEM accounting (generation-aware) ----
    xbytes = jnp.dtype(x.dtype).itemsize
    wbytes = jnp.dtype(compute_dtype).itemsize
    weight_elems = in_p * h_p + h_p * out_p + (in_p * out_p if has_shortcut else 0)
    bias_bytes = (h_p + out_p) * 4
    resident_bytes = weight_elems * wbytes + bias_bytes      # single-buffered weights

    per_row_bytes = (
        in_p * xbytes * 3          # x tile (double-buffered) + relu(x)
        + out_p * xbytes * 2       # out tile (double-buffered)
        + h_p * (4 + wbytes)       # net (f32) + h1 (compute dtype)
        + out_p * 8                # dx + (x_s + dx) in f32
    )

    capacity = _vmem_capacity_bytes()
    budget = int(capacity * vmem_fraction)
    avail = budget - resident_bytes
    if avail < 8 * per_row_bytes:
        # TODO(synk): add a K-tiled reduction grid (f32 accumulator + pl.when
        # init) for feature/hidden dims too large to keep weights VMEM-resident.
        raise ValueError(
            f"ResnetBlockFC padded weights ({resident_bytes / 2**20:.1f} MiB) "
            f"do not leave room for an 8-row tile within the "
            f"{budget / 2**20:.1f} MiB VMEM budget; reduce size_h/size_in."
        )
    max_tile = max(8, (avail // per_row_bytes) // 8 * 8)

    # ---- row tile / grid ----
    tile, n_pad = _choose_tile(n8, min(int(tile_n), max_tile))
    grid = (n_pad // tile,)

    # Explicit VMEM limit from the real footprint (headroom covers compiler
    # scratch and the double-buffered-weights fallback path).
    footprint = resident_bytes + tile * per_row_bytes
    vmem_limit = int(min(capacity,
                         max(32 << 20,
                             footprint + weight_elems * wbytes + (8 << 20))))

    # ---- pad operands (zeros => no value leakage; skipped when already aligned) ----
    x2p = _pad2(x2, n_pad, in_p)
    w0p = _pad2(w0, in_p, h_p)
    b0p = _pad2(b0.reshape(1, -1), 1, h_p)
    w1p = _pad2(w1, h_p, out_p)
    b1p = _pad2(b1.reshape(1, -1), 1, out_p)
    args = [x2p, w0p, b0p, w1p, b1p]
    if has_shortcut:
        args.append(_pad2(ws, in_p, out_p))

    kernel = functools.partial(
        _resnet_block_kernel,
        has_shortcut=has_shortcut, final_nl=final_nl, compute_dtype=compute_dtype,
    )
    out_shape = jax.ShapeDtypeStruct((n_pad, out_p), x.dtype)

    def build(weight_mode):
        # Grid-invariant operands: same block every step -> single buffer.
        def const_spec(shape):
            if weight_mode is None:
                return pl.BlockSpec(shape, lambda i: (0, 0))
            return pl.BlockSpec(shape, lambda i: (0, 0), pipeline_mode=weight_mode)

        in_specs = [
            pl.BlockSpec((tile, in_p), lambda i: (i, 0)),    # x rows (pipelined)
            const_spec((in_p, h_p)),                         # w0
            const_spec((1, h_p)),                            # b0
            const_spec((h_p, out_p)),                        # w1
            const_spec((1, out_p)),                          # b1
        ]
        if has_shortcut:
            in_specs.append(const_spec((in_p, out_p)))       # ws
        return pl.pallas_call(
            kernel,
            out_shape=out_shape,
            grid_spec=pltpu.PrefetchScalarGridSpec(
                num_scalar_prefetch=0,
                grid=grid,
                in_specs=in_specs,
                out_specs=pl.BlockSpec((tile, out_p), lambda i: (i, 0)),
            ),
            compiler_params=pltpu.CompilerParams(
                dimension_semantics=("parallel",),
                vmem_limit_bytes=vmem_limit,
            ),
        )

    try:
        out = build(pl.Buffered(1))(*args)
    except Exception:
        # Fallback if single-buffered pipeline_mode is rejected by this jax build.
        out = build(None)(*args)

    if n_pad != n or out_p != size_out:
        out = out[:n, :size_out]
    return out.reshape(*lead_shape, size_out)


def init_resnet_block_params(key, size_in, size_out=None, size_h=None,
                             dtype=jnp.float32):
    """Deterministic synthetic init matching the module's parameter shapes.

    Note: fc_1.weight is zero-initialized (as in the PyTorch __init__).
    Weights are stored transposed vs torch: (in_features, out_features).
    """
    if size_out is None:
        size_out = size_in
    if size_h is None:
        size_h = min(size_in, size_out)

    k0, k1, k2, k3 = jax.random.split(key, 4)
    params = {
        "w0": jax.random.normal(k0, (size_in, size_h), dtype) * 0.1,
        "b0": jax.random.normal(k1, (1, size_h), dtype) * 0.1,
        "w1": jnp.zeros((size_h, size_out), dtype),  # nn.init.zeros_(fc_1.weight)
        "b1": jax.random.normal(k2, (1, size_out), dtype) * 0.1,
    }
    if size_in != size_out:
        params["ws"] = jax.random.normal(k3, (size_in, size_out), dtype) * 0.1
    else:
        params["ws"] = None
    return params


def _ref_forward(x, params, final_nl=False):
    """Pure-JAX reference mirroring the PyTorch forward."""
    w0, b0, w1, b1, ws = (params["w0"], params["b0"], params["w1"],
                          params["b1"], params["ws"])
    net = jax.nn.relu(x) @ w0 + b0.reshape(-1)
    dx = jax.nn.relu(net) @ w1 + b1.reshape(-1)
    x_s = x @ ws if ws is not None else x
    out = x_s + dx
    if final_nl:
        out = jnp.where(out >= 0, out, 0.2 * out)
    return out


if __name__ == "__main__":
    key = jax.random.PRNGKey(0)
    kx, kx2, kp1, kp2 = jax.random.split(key, 4)

    # Case 1: size_in != size_out (linear shortcut), 3-D input [B, S, size_in]
    B, S, size_in, size_h, size_out = 2, 8, 16, 16, 32
    x = jax.random.normal(kx, (B, S, size_in), jnp.float32)
    params = init_resnet_block_params(kp1, size_in, size_out, size_h)
    out = resnet_block_fc(x, params, final_nl=True)
    out = jax.block_until_ready(out)
    ref = _ref_forward(x, params, final_nl=True)
    assert out.shape == (B, S, size_out)
    assert jnp.allclose(out, ref, atol=1e-5, rtol=1e-5)

    # Case 2: size_in == size_out (identity shortcut), no final nonlinearity
    params2 = init_resnet_block_params(kp2, size_in)
    out2 = resnet_block_fc(x, params2, final_nl=False)
    out2 = jax.block_until_ready(out2)
    ref2 = _ref_forward(x, params2, final_nl=False)
    assert out2.shape == (B, S, size_in)
    assert jnp.allclose(out2, ref2, atol=1e-5, rtol=1e-5)

    # Case 3: ragged row count + multi-step grid (exercises row-padding path)
    x3 = jax.random.normal(kx2, (3, 100, size_in), jnp.float32)  # n = 300 rows
    out3 = resnet_block_fc(x3, params, final_nl=True, tile_n=128)
    out3 = jax.block_until_ready(out3)
    ref3 = _ref_forward(x3, params, final_nl=True)
    assert out3.shape == (3, 100, size_out)
    assert jnp.allclose(out3, ref3, atol=1e-5, rtol=1e-5)

    print("KERNEL_OK")
</pallas_src>

<mosaic_0001>
module attributes {stable_mosaic.version = 11 : i64} {
  func.func @_resnet_block_kernel(%arg0: i32, %arg1: memref<8x128xf32, #tpu.memory_space<vmem>>, %arg2: memref<128x128xf32, #tpu.memory_space<vmem>>, %arg3: memref<1x128xf32, #tpu.memory_space<vmem>>, %arg4: memref<128x128xf32, #tpu.memory_space<vmem>>, %arg5: memref<1x128xf32, #tpu.memory_space<vmem>>, %arg6: memref<128x128xf32, #tpu.memory_space<vmem>>, %arg7: memref<8x128xf32, #tpu.memory_space<vmem>>) attributes {dimension_semantics = [#tpu.dimension_semantics<parallel>], iteration_bounds = array<i64: 2>, scalar_prefetch = 0 : i64, scratch_operands = 0 : i64, tpu.core_type = #tpu.core_type<tc>, window_params = [{transform_indices = @transform_0, window_bounds = array<i64: 8, 128>}, {pipeline_mode = #tpu.pipeline_mode<synchronous>, transform_indices = @transform_1, window_bounds = array<i64: 128, 128>}, {pipeline_mode = #tpu.pipeline_mode<synchronous>, transform_indices = @transform_2, window_bounds = array<i64: 1, 128>}, {pipeline_mode = #tpu.pipeline_mode<synchronous>, transform_indices = @transform_3, window_bounds = array<i64: 128, 128>}, {pipeline_mode = #tpu.pipeline_mode<synchronous>, transform_indices = @transform_4, window_bounds = array<i64: 1, 128>}, {pipeline_mode = #tpu.pipeline_mode<synchronous>, transform_indices = @transform_5, window_bounds = array<i64: 128, 128>}, {transform_indices = @transform_6, window_bounds = array<i64: 8, 128>}]} {
    %c0 = arith.constant 0 : index
    %c0_0 = arith.constant 0 : index
    %0 = vector.load %arg1[%c0, %c0_0] : memref<8x128xf32, #tpu.memory_space<vmem>>, vector<8x128xf32>
    %cst = arith.constant 0.000000e+00 : f32
    %1 = vector.broadcast %cst : f32 to vector<8x128xf32>
    %2 = arith.maximumf %0, %1 : vector<8x128xf32>
    %c0_1 = arith.constant 0 : index
    %c0_2 = arith.constant 0 : index
    %3 = vector.load %arg2[%c0_1, %c0_2] : memref<128x128xf32, #tpu.memory_space<vmem>>, vector<128x128xf32>
    %cst_3 = arith.constant dense<0.000000e+00> : vector<8x128xf32>
    %4 = tpu.matmul %2, %3, %cst_3 {dimension_numbers = #tpu.dot_dimension_numbers<[1], [0], [0], [1], [0, 0, 1, 1], [], []>} : vector<8x128xf32>, vector<128x128xf32>, vector<8x128xf32> -> vector<8x128xf32>
    %c0_4 = arith.constant 0 : index
    %c0_5 = arith.constant 0 : index
    %5 = vector.load %arg3[%c0_4, %c0_5] : memref<1x128xf32, #tpu.memory_space<vmem>>, vector<1x128xf32>
    %6 = vector.broadcast %5 : vector<1x128xf32> to vector<8x128xf32>
    %7 = arith.addf %4, %6 : vector<8x128xf32>
    %cst_6 = arith.constant 0.000000e+00 : f32
    %8 = vector.broadcast %cst_6 : f32 to vector<8x128xf32>
    %9 = arith.maximumf %7, %8 : vector<8x128xf32>
    %c0_7 = arith.constant 0 : index
    %c0_8 = arith.constant 0 : index
    %10 = vector.load %arg4[%c0_7, %c0_8] : memref<128x128xf32, #tpu.memory_space<vmem>>, vector<128x128xf32>
    %cst_9 = arith.constant dense<0.000000e+00> : vector<8x128xf32>
    %11 = tpu.matmul %9, %10, %cst_9 {dimension_numbers = #tpu.dot_dimension_numbers<[1], [0], [0], [1], [0, 0, 1, 1], [], []>} : vector<8x128xf32>, vector<128x128xf32>, vector<8x128xf32> -> vector<8x128xf32>
    %c0_10 = arith.constant 0 : index
    %c0_11 = arith.constant 0 : index
    %12 = vector.load %arg5[%c0_10, %c0_11] : memref<1x128xf32, #tpu.memory_space<vmem>>, vector<1x128xf32>
    %13 = vector.broadcast %12 : vector<1x128xf32> to vector<8x128xf32>
    %14 = arith.addf %11, %13 : vector<8x128xf32>
    %c0_12 = arith.constant 0 : index
    %c0_13 = arith.constant 0 : index
    %15 = vector.load %arg6[%c0_12, %c0_13] : memref<128x128xf32, #tpu.memory_space<vmem>>, vector<128x128xf32>
    %cst_14 = arith.constant dense<0.000000e+00> : vector<8x128xf32>
    %16 = tpu.matmul %0, %15, %cst_14 {dimension_numbers = #tpu.dot_dimension_numbers<[1], [0], [0], [1], [0, 0, 1, 1], [], []>} : vector<8x128xf32>, vector<128x128xf32>, vector<8x128xf32> -> vector<8x128xf32>
    %17 = arith.addf %16, %14 : vector<8x128xf32>
    %cst_15 = arith.constant 2.000000e-01 : f32
    %18 = vector.broadcast %cst_15 : f32 to vector<8x128xf32>
    %19 = arith.mulf %18, %17 : vector<8x128xf32>
    %20 = arith.maximumf %17, %19 : vector<8x128xf32>
    %c0_16 = arith.constant 0 : index
    %c0_17 = arith.constant 0 : index
    %21 = vector.load %arg7[%c0_16, %c0_17] : memref<8x128xf32, #tpu.memory_space<vmem>>, vector<8x128xf32>
    tpu.vector_store %arg7[%c0_16, %c0_17], %20 {strides = array<i32>} : memref<8x128xf32, #tpu.memory_space<vmem>>, vector<8x128xf32>,
    return
  }
  func.func @transform_0(%arg0: i32) -> (i32, i32) {
    %c0_i32 = arith.constant 0 : i32
    %c0_i32_0 = arith.constant 0 : i32
    return %arg0, %c0_i32 : i32, i32
  }
  func.func @transform_1(%arg0: i32) -> (i32, i32) {
    %c0_i32 = arith.constant 0 : i32
    %c0_i32_0 = arith.constant 0 : i32
    %c0_i32_1 = arith.constant 0 : i32
    return %c0_i32, %c0_i32_0 : i32, i32
  }
  func.func @transform_2(%arg0: i32) -> (i32, i32) {
    %c0_i32 = arith.constant 0 : i32
    %c0_i32_0 = arith.constant 0 : i32
    %c0_i32_1 = arith.constant 0 : i32
    return %c0_i32, %c0_i32_0 : i32, i32
  }
  func.func @transform_3(%arg0: i32) -> (i32, i32) {
    %c0_i32 = arith.constant 0 : i32
    %c0_i32_0 = arith.constant 0 : i32
    %c0_i32_1 = arith.constant 0 : i32
    return %c0_i32, %c0_i32_0 : i32, i32
  }
  func.func @transform_4(%arg0: i32) -> (i32, i32) {
    %c0_i32 = arith.constant 0 : i32
    %c0_i32_0 = arith.constant 0 : i32
    %c0_i32_1 = arith.constant 0 : i32
    return %c0_i32, %c0_i32_0 : i32, i32
  }
  func.func @transform_5(%arg0: i32) -> (i32, i32) {
    %c0_i32 = arith.constant 0 : i32
    %c0_i32_0 = arith.constant 0 : i32
    %c0_i32_1 = arith.constant 0 : i32
    return %c0_i32, %c0_i32_0 : i32, i32
  }
  func.func @transform_6(%arg0: i32) -> (i32, i32) {
    %c0_i32 = arith.constant 0 : i32
    %c0_i32_0 = arith.constant 0 : i32
    return %arg0, %c0_i32 : i32, i32
  }
}

module attributes {stable_mosaic.version = 11 : i64} {
  func.func @_resnet_block_kernel(%arg0: i32, %arg1: memref<8x128xf32, #tpu.memory_space<vmem>>, %arg2: memref<128x128xf32, #tpu.memory_space<vmem>>, %arg3: memref<1x128xf32, #tpu.memory_space<vmem>>, %arg4: memref<128x128xf32, #tpu.memory_space<vmem>>, %arg5: memref<1x128xf32, #tpu.memory_space<vmem>>, %arg6: memref<128x128xf32, #tpu.memory_space<vmem>>, %arg7: memref<8x128xf32, #tpu.memory_space<vmem>>) attributes {dimension_semantics = [#tpu.dimension_semantics<parallel>], iteration_bounds = array<i64: 2>, scalar_prefetch = 0 : i64, scratch_operands = 0 : i64, tpu.core_type = #tpu.core_type<tc>, window_params = [{transform_indices = @transform_0, window_bounds = array<i64: 8, 128>}, {pipeline_mode = #tpu.pipeline_mode<synchronous>, transform_indices = @transform_1, window_bounds = array<i64: 128, 128>}, {pipeline_mode = #tpu.pipeline_mode<synchronous>, transform_indices = @transform_2, window_bounds = array<i64: 1, 128>}, {pipeline_mode = #tpu.pipeline_mode<synchronous>, transform_indices = @transform_3, window_bounds = array<i64: 128, 128>}, {pipeline_mode = #tpu.pipeline_mode<synchronous>, transform_indices = @transform_4, window_bounds = array<i64: 1, 128>}, {pipeline_mode = #tpu.pipeline_mode<synchronous>, transform_indices = @transform_5, window_bounds = array<i64: 128, 128>}, {transform_indices = @transform_6, window_bounds = array<i64: 8, 128>}]} {
    %c0 = arith.constant 0 : index
    %c0_0 = arith.constant 0 : index
    %0 = vector.load %arg1[%c0, %c0_0] : memref<8x128xf32, #tpu.memory_space<vmem>>, vector<8x128xf32>
    %cst = arith.constant 0.000000e+00 : f32
    %1 = vector.broadcast %cst : f32 to vector<8x128xf32>
    %2 = arith.maximumf %0, %1 : vector<8x128xf32>
    %c0_1 = arith.constant 0 : index
    %c0_2 = arith.constant 0 : index
    %3 = vector.load %arg2[%c0_1, %c0_2] : memref<128x128xf32, #tpu.memory_space<vmem>>, vector<128x128xf32>
    %cst_3 = arith.constant dense<0.000000e+00> : vector<8x128xf32>
    %4 = tpu.matmul %2, %3, %cst_3 {dimension_numbers = #tpu.dot_dimension_numbers<[1], [0], [0], [1], [0, 0, 1, 1], [], []>} : vector<8x128xf32>, vector<128x128xf32>, vector<8x128xf32> -> vector<8x128xf32>
    %c0_4 = arith.constant 0 : index
    %c0_5 = arith.constant 0 : index
    %5 = vector.load %arg3[%c0_4, %c0_5] : memref<1x128xf32, #tpu.memory_space<vmem>>, vector<1x128xf32>
    %6 = vector.broadcast %5 : vector<1x128xf32> to vector<8x128xf32>
    %7 = arith.addf %4, %6 : vector<8x128xf32>
    %cst_6 = arith.constant 0.000000e+00 : f32
    %8 = vector.broadcast %cst_6 : f32 to vector<8x128xf32>
    %9 = arith.maximumf %7, %8 : vector<8x128xf32>
    %c0_7 = arith.constant 0 : index
    %c0_8 = arith.constant 0 : index
    %10 = vector.load %arg4[%c0_7, %c0_8] : memref<128x128xf32, #tpu.memory_space<vmem>>, vector<128x128xf32>
    %cst_9 = arith.constant dense<0.000000e+00> : vector<8x128xf32>
    %11 = tpu.matmul %9, %10, %cst_9 {dimension_numbers = #tpu.dot_dimension_numbers<[1], [0], [0], [1], [0, 0, 1, 1], [], []>} : vector<8x128xf32>, vector<128x128xf32>, vector<8x128xf32> -> vector<8x128xf32>
    %c0_10 = arith.constant 0 : index
    %c0_11 = arith.constant 0 : index
    %12 = vector.load %arg5[%c0_10, %c0_11] : memref<1x128xf32, #tpu.memory_space<vmem>>, vector<1x128xf32>
    %13 = vector.broadcast %12 : vector<1x128xf32> to vector<8x128xf32>
    %14 = arith.addf %11, %13 : vector<8x128xf32>
    %c0_12 = arith.constant 0 : index
    %c0_13 = arith.constant 0 : index
    %15 = vector.load %arg6[%c0_12, %c0_13] : memref<128x128xf32, #tpu.memory_space<vmem>>, vector<128x128xf32>
    %cst_14 = arith.constant dense<0.000000e+00> : vector<8x128xf32>
    %16 = tpu.matmul %0, %15, %cst_14 {dimension_numbers = #tpu.dot_dimension_numbers<[1], [0], [0], [1], [0, 0, 1, 1], [], []>} : vector<8x128xf32>, vector<128x128xf32>, vector<8x128xf32> -> vector<8x128xf32>
    %17 = arith.addf %16, %14 : vector<8x128xf32>
    %cst_15 = arith.constant 2.000000e-01 : f32
    %18 = vector.broadcast %cst_15 : f32 to vector<8x128xf32>
    %19 = arith.mulf %18, %17 : vector<8x128xf32>
    %20 = arith.maximumf %17, %19 : vector<8x128xf32>
    %c0_16 = arith.constant 0 : index
    %c0_17 = arith.constant 0 : index
    %21 = vector.load %arg7[%c0_16, %c0_17] : memref<8x128xf32, #tpu.memory_space<vmem>>, vector<8x128xf32>
    tpu.vector_store %arg7[%c0_16, %c0_17], %20 {strides = array<i32>} : memref<8x128xf32, #tpu.memory_space<vmem>>, vector<8x128xf32>,
    return
  }
  func.func @transform_0(%arg0: i32) -> (i32, i32) {
    %c0_i32 = arith.constant 0 : i32
    %c0_i32_0 = arith.constant 0 : i32
    return %arg0, %c0_i32 : i32, i32
  }
  func.func @transform_1(%arg0: i32) -> (i32, i32) {
    %c0_i32 = arith.constant 0 : i32
    %c0_i32_0 = arith.constant 0 : i32
    %c0_i32_1 = arith.constant 0 : i32
    return %c0_i32, %c0_i32_0 : i32, i32
  }
  func.func @transform_2(%arg0: i32) -> (i32, i32) {
    %c0_i32 = arith.constant 0 : i32
    %c0_i32_0 = arith.constant 0 : i32
    %c0_i32_1 = arith.constant 0 : i32
    return %c0_i32, %c0_i32_0 : i32, i32
  }
  func.func @transform_3(%arg0: i32) -> (i32, i32) {
    %c0_i32 = arith.constant 0 : i32
    %c0_i32_0 = arith.constant 0 : i32
    %c0_i32_1 = arith.constant 0 : i32
    return %c0_i32, %c0_i32_0 : i32, i32
  }
  func.func @transform_4(%arg0: i32) -> (i32, i32) {
    %c0_i32 = arith.constant 0 : i32
    %c0_i32_0 = arith.constant 0 : i32
    %c0_i32_1 = arith.constant 0 : i32
    return %c0_i32, %c0_i32_0 : i32, i32
  }
  func.func @transform_5(%arg0: i32) -> (i32, i32) {
    %c0_i32 = arith.constant 0 : i32
    %c0_i32_0 = arith.constant 0 : i32
    %c0_i32_1 = arith.constant 0 : i32
    return %c0_i32, %c0_i32_0 : i32, i32
  }
  func.func @transform_6(%arg0: i32) -> (i32, i32) {
    %c0_i32 = arith.constant 0 : i32
    %c0_i32_0 = arith.constant 0 : i32
    return %arg0, %c0_i32 : i32, i32
  }
}

</mosaic_0001>

<llo_original>
// kernel: tpu_custom_call.1
$region0: #{tpu_custom_call.1}
  #allocation0 [shape = 'u32[]', space=smem, size = 0x4, offset = 0x4, fixed_abs, tag = 'smem constant byte address 0x4 - core index']
  #allocation1 [shape = 'u32[144,128]{1,0:T(1,128)}', space=vmem, size = 0x12000, scoped, tag = 'internal scratch']
  %s0 = inlined_call_operand.hbm [shape: f32[16,128], index: 0, kind: input, shape index: {}]
  %s1 = inlined_call_operand.hbm [shape: f32[128,128], index: 1, kind: input, shape index: {}]
  %s2 = inlined_call_operand.vmem [shape: f32[1,128], index: 2, kind: input, shape index: {}]
  %s3 = inlined_call_operand.hbm [shape: f32[128,128], index: 3, kind: input, shape index: {}]
  %s4 = inlined_call_operand.vmem [shape: f32[1,128], index: 4, kind: input, shape index: {}]
  %s5 = inlined_call_operand.hbm [shape: f32[128,128], index: 5, kind: input, shape index: {}]
  %s6 = inlined_call_operand.hbm [shape: f32[16,128], index: 6, kind: output, shape index: {}]
  %s7 = sld [smem:[#allocation0]]
  $region73: #{tpu_custom_call.1} parent=0
    _
  %s9 = ssub.s32 1, %s7
  %s10 = scalar_select 0, %s9, %s7
  $region1: #{tpu_custom_call.1} parent=0
    #allocation2 [shape = 'u8[8192]{0}', space=vmem, size = 0x2000, scoped, tag = 'input window, operand 0']
    #allocation3 [shape = 's32[2]{0}', space=sflag, size = 0x8, scoped, tag = 'scoped memory for tpu_custom_call.1']
    #allocation4 [shape = 's32[2]{0}', space=sflag, size = 0x8, scoped, tag = 'scoped memory for tpu_custom_call.1']
    #allocation5 [shape = 'u8[65536]{0}', space=vmem, size = 0x10000, scoped, tag = 'input window, operand 1, single buffered']
    #allocation6 [shape = 's32[1]{0}', space=sflag, size = 0x4, scoped, tag = 'scoped memory for tpu_custom_call.1']
    #allocation7 [shape = 'u8[65536]{0}', space=vmem, size = 0x10000, scoped, tag = 'input window, operand 3, single buffered']
    #allocation8 [shape = 'u8[65536]{0}', space=vmem, size = 0x10000, scoped, tag = 'input window, operand 5, single buffered']
    #allocation9 [shape = 's32[1]{0}', space=sflag, size = 0x4, scoped, tag = 'scoped memory for tpu_custom_call.1']
    #allocation10 [shape = 'u8[8192]{0}', space=vmem, size = 0x2000, scoped, tag = 'output window, operand 0']
    %11 = vsyncpa [#allocation3], 0
    %s12 = scalar_lea.sflag [#allocation3], 1
    %13 = vsyncpa %s12, 0
    %14 = vsyncpa [#allocation6], 0
    %15 = vsyncpa [#allocation9], 0
    %16 = vsyncpa [#allocation4], 0
    %s17 = scalar_lea.sflag [#allocation4], 1
    %18 = vsyncpa %s17, 0
    loop: start=0, step=1, limit=4
    $region2: #{tpu_custom_call.1} parent=1 // loop_pre_header
      _
    $region3: #{tpu_custom_call.1} parent=1 // loop_header
      %s20 = sphi 0, %s24
      %p21 = scmp.ge.s32.totalorder %s20, 4
      %s30 = sphi 0, %s32
      %s33 = sphi 0, %s30
      %s34 = sphi 0, %s33
      %s50 = sphi 0, %s34
      %s54 = sphi 0, %s54
      %s56 = sphi 0, %s54
      %s57 = sphi 0, %s56
      %s71 = sphi 0, %s57
      %s75 = sphi 0, %s75
      %s77 = sphi 0, %s75
      %s78 = sphi 0, %s77
      %s92 = sphi 0, %s78
      %s96 = sphi 0, %s96
      %s98 = sphi 0, %s96
      %s99 = sphi 0, %s98
      %s113 = sphi 0, %s99
      %s117 = sphi 0, %s117
      %s119 = sphi 0, %s117
      %s120 = sphi 0, %s119
      %s134 = sphi 0, %s120
      %s138 = sphi 0, %s138
      %s140 = sphi 0, %s138
      %s141 = sphi 0, %s140
      %s155 = sphi 0, %s141
      %s161 = sphi 0, %s163
      %s164 = sphi 0, %s161
      %s165 = sphi 0, %s164
      %s181 = sphi 0, %s165
    $region4: #{tpu_custom_call.1} parent=1 // loop_header_branch
      %23 = sbr.rel (%p21) target = $region8
    $region5: #{tpu_custom_call.1} parent=1 // loop_body
      %s25 = ssub.s32 %s20, 1
      %s26 = ssub.s32 %s20, 2
      %s27 = sadd.s32 %s20, 1
      %s28 = ssub.s32 %s20, %s27
      %p29 = scmp.eq.s32.totalorder %s28, 0
      %s31 = sadd.s32 %s30, 1
      %s32 = scalar_select %p29, %s30, %s31
      %p35 = pneg %p29
      %p36 = scmp.eq.s32.totalorder %s20, 1
      %p37 = por %p35, %p36
      %p38 = scmp.ne.s32.totalorder %s30, %s33
      %p39 = scmp.eq.s32.totalorder %s20, 0
      %p40 = por %p38, %p39
      %p41 = scmp.ne.s32.totalorder %s30, %s33
      %p42 = scmp.eq.s32.totalorder %s25, 1
      %p43 = por %p41, %p42
      %p44 = scmp.ne.s32.totalorder %s33, %s34
      %p45 = scmp.eq.s32.totalorder %s25, 0
      %p46 = por %p44, %p45
      %p47 = scmp.ne.s32.totalorder %s33, %s34
      %p48 = scmp.eq.s32.totalorder %s26, 1
      %p49 = por %p47, %p48
      %p51 = scmp.ne.s32.totalorder %s34, %s50
      %p52 = scmp.eq.s32.totalorder %s26, 0
      %p53 = por %p51, %p52
      %s55 = sadd.s32 %s54, 1
      %p58 = scmp.eq.s32.totalorder %s20, 1
      %p59 = scmp.ne.s32.totalorder %s54, %s56
      %p60 = scmp.eq.s32.totalorder %s20, 0
      %p61 = por %p59, %p60
      %p62 = scmp.ne.s32.totalorder %s54, %s56
      %p63 = scmp.eq.s32.totalorder %s25, 1
      %p64 = por %p62, %p63
      %p65 = scmp.ne.s32.totalorder %s56, %s57
      %p66 = scmp.eq.s32.totalorder %s25, 0
      %p67 = por %p65, %p66
      %p68 = scmp.ne.s32.totalorder %s56, %s57
      %p69 = scmp.eq.s32.totalorder %s26, 1
      %p70 = por %p68, %p69
      %p72 = scmp.ne.s32.totalorder %s57, %s71
      %p73 = scmp.eq.s32.totalorder %s26, 0
      %p74 = por %p72, %p73
      %s76 = sadd.s32 %s75, 1
      %p79 = scmp.eq.s32.totalorder %s20, 1
      %p80 = scmp.ne.s32.totalorder %s75, %s77
      %p81 = scmp.eq.s32.totalorder %s20, 0
      %p82 = por %p80, %p81
      %p83 = scmp.ne.s32.totalorder %s75, %s77
      %p84 = scmp.eq.s32.totalorder %s25, 1
      %p85 = por %p83, %p84
      %p86 = scmp.ne.s32.totalorder %s77, %s78
      %p87 = scmp.eq.s32.totalorder %s25, 0
      %p88 = por %p86, %p87
      %p89 = scmp.ne.s32.totalorder %s77, %s78
      %p90 = scmp.eq.s32.totalorder %s26, 1
      %p91 = por %p89, %p90
      %p93 = scmp.ne.s32.totalorder %s78, %s92
      %p94 = scmp.eq.s32.totalorder %s26, 0
      %p95 = por %p93, %p94
      %s97 = sadd.s32 %s96, 1
      %p100 = scmp.eq.s32.totalorder %s20, 1
      %p101 = scmp.ne.s32.totalorder %s96, %s98
      %p102 = scmp.eq.s32.totalorder %s20, 0
      %p103 = por %p101, %p102
      %p104 = scmp.ne.s32.totalorder %s96, %s98
      %p105 = scmp.eq.s32.totalorder %s25, 1
      %p106 = por %p104, %p105
      %p107 = scmp.ne.s32.totalorder %s98, %s99
      %p108 = scmp.eq.s32.totalorder %s25, 0
      %p109 = por %p107, %p108
      %p110 = scmp.ne.s32.totalorder %s98, %s99
      %p111 = scmp.eq.s32.totalorder %s26, 1
      %p112 = por %p110, %p111
      %p114 = scmp.ne.s32.totalorder %s99, %s113
      %p115 = scmp.eq.s32.totalorder %s26, 0
      %p116 = por %p114, %p115
      %s118 = sadd.s32 %s117, 1
      %p121 = scmp.eq.s32.totalorder %s20, 1
      %p122 = scmp.ne.s32.totalorder %s117, %s119
      %p123 = scmp.eq.s32.totalorder %s20, 0
      %p124 = por %p122, %p123
      %p125 = scmp.ne.s32.totalorder %s117, %s119
      %p126 = scmp.eq.s32.totalorder %s25, 1
      %p127 = por %p125, %p126
      %p128 = scmp.ne.s32.totalorder %s119, %s120
      %p129 = scmp.eq.s32.totalorder %s25, 0
      %p130 = por %p128, %p129
      %p131 = scmp.ne.s32.totalorder %s119, %s120
      %p132 = scmp.eq.s32.totalorder %s26, 1
      %p133 = por %p131, %p132
      %p135 = scmp.ne.s32.totalorder %s120, %s134
      %p136 = scmp.eq.s32.totalorder %s26, 0
      %p137 = por %p135, %p136
      %s139 = sadd.s32 %s138, 1
      %p142 = scmp.eq.s32.totalorder %s20, 1
      %p143 = scmp.ne.s32.totalorder %s138, %s140
      %p144 = scmp.eq.s32.totalorder %s20, 0
      %p145 = por %p143, %p144
      %p146 = scmp.ne.s32.totalorder %s138, %s140
      %p147 = scmp.eq.s32.totalorder %s25, 1
      %p148 = por %p146, %p147
      %p149 = scmp.ne.s32.totalorder %s140, %s141
      %p150 = scmp.eq.s32.totalorder %s25, 0
      %p151 = por %p149, %p150
      %p152 = scmp.ne.s32.totalorder %s140, %s141
      %p153 = scmp.eq.s32.totalorder %s26, 1
      %p154 = por %p152, %p153
      %p156 = scmp.ne.s32.totalorder %s141, %s155
      %p157 = scmp.eq.s32.totalorder %s26, 0
      %p158 = por %p156, %p157
      %s159 = ssub.s32 %s20, %s27
      %p160 = scmp.eq.s32.totalorder %s159, 0
      %s162 = sadd.s32 %s161, 1
      %s163 = scalar_select %p160, %s161, %s162
      %p166 = pneg %p160
      %p167 = scmp.eq.s32.totalorder %s20, 1
      %p168 = por %p166, %p167
      %p169 = scmp.ne.s32.totalorder %s161, %s164
      %p170 = scmp.eq.s32.totalorder %s20, 0
      %p171 = por %p169, %p170
      %p172 = scmp.ne.s32.totalorder %s161, %s164
      %p173 = scmp.eq.s32.totalorder %s25, 1
      %p174 = por %p172, %p173
      %p175 = scmp.ne.s32.totalorder %s164, %s165
      %p176 = scmp.eq.s32.totalorder %s25, 0
      %p177 = por %p175, %p176
      %p178 = scmp.ne.s32.totalorder %s164, %s165
      %p179 = scmp.eq.s32.totalorder %s26, 1
      %p180 = por %p178, %p179
      %p182 = scmp.ne.s32.totalorder %s165, %s181
      %p183 = scmp.eq.s32.totalorder %s26, 0
      %p184 = por %p182, %p183
      %p185 = scmp.le.s32.totalorder 1, %s20
      %p186 = scmp.lt.s32.totalorder %s20, 3
      %p187 = pnand %p185, %p186
      %p188 = pneg %p187
      // Predicated region
      $region9: #{tpu_custom_call.1} parent=5 // pred_check
        _
      $region10: #{tpu_custom_call.1} parent=5 // pred_check_branch
        %190 = sbr.rel (%p187) target = $region12
      $region11: #{tpu_custom_call.1} parent=5 // pred_region
        %s191 = ssub.s32 %s20, 1
        // Predicated region
        $region13: #{tpu_custom_call.1} parent=11 // pred_check
          %p192 = pneg %p67
        $region14: #{tpu_custom_call.1} parent=11 // pred_check_branch
          %194 = sbr.rel (%p192) target = $region16
        $region15: #{tpu_custom_call.1} parent=11 // pred_region
          %s196 = ssub.s32 2048, 2048
          %197 = vsyncadd [#allocation6], %s196
          %s198 = sshll.u32 [#allocation5], 4
          %s199 = int_to_ptr.vmem [resolvable:$true] %s198
          %204 = dma.hbm_to_vmem [thread:$0]  %s1, 2048, %s199, [#allocation6], 128, 128, 8
        $region16: #{tpu_custom_call.1} parent=11 // pred_fallthru
          _
        // Predicated region
        $region17: #{tpu_custom_call.1} parent=11 // pred_check
          %p205 = pneg %p88
        $region18: #{tpu_custom_call.1} parent=11 // pred_check_branch
          %207 = sbr.rel (%p205) target = $region20
        $region19: #{tpu_custom_call.1} parent=11 // pred_region
          _
        $region20: #{tpu_custom_call.1} parent=11 // pred_fallthru
          _
        // Predicated region
        $region21: #{tpu_custom_call.1} parent=11 // pred_check
          %p208 = pneg %p109
        $region22: #{tpu_custom_call.1} parent=11 // pred_check_branch
          %210 = sbr.rel (%p208) target = $region24
        $region23: #{tpu_custom_call.1} parent=11 // pred_region
          %s212 = ssub.s32 2048, 2048
          %213 = vsyncadd [#allocation6], %s212
          %s214 = sshll.u32 [#allocation7], 4
          %s215 = int_to_ptr.vmem [resolvable:$true] %s214
          %220 = dma.hbm_to_vmem [thread:$0]  %s3, 2048, %s215, [#allocation6], 128, 128, 8
        $region24: #{tpu_custom_call.1} parent=11 // pred_fallthru
          _
        // Predicated region
        $region25: #{tpu_custom_call.1} parent=11 // pred_check
          %p221 = pneg %p130
        $region26: #{tpu_custom_call.1} parent=11 // pred_check_branch
          %223 = sbr.rel (%p221) target = $region28
        $region27: #{tpu_custom_call.1} parent=11 // pred_region
          _
        $region28: #{tpu_custom_call.1} parent=11 // pred_fallthru
          _
        // Predicated region
        $region29: #{tpu_custom_call.1} parent=11 // pred_check
          %p224 = pneg %p151
        $region30: #{tpu_custom_call.1} parent=11 // pred_check_branch
          %226 = sbr.rel (%p224) target = $region32
        $region31: #{tpu_custom_call.1} parent=11 // pred_region
          %s228 = ssub.s32 2048, 2048
          %229 = vsyncadd [#allocation9], %s228
          %s230 = sshll.u32 [#allocation8], 4
          %s231 = int_to_ptr.vmem [resolvable:$true] %s230
          %236 = dma.hbm_to_vmem [thread:$0]  %s5, 2048, %s231, [#allocation9], 128, 128, 8
        $region32: #{tpu_custom_call.1} parent=11 // pred_fallthru
          _
      $region12: #{tpu_custom_call.1} parent=5 // pred_fallthru
        _
      %p237 = scmp.lt.s32.totalorder %s20, 2
      // Predicated region
      $region33: #{tpu_custom_call.1} parent=5 // pred_check
        %p238 = pneg %p237
      $region34: #{tpu_custom_call.1} parent=5 // pred_check_branch
        %240 = sbr.rel (%p238) target = $region36
      $region35: #{tpu_custom_call.1} parent=5 // pred_region
        // Predicated region
        $region37: #{tpu_custom_call.1} parent=35 // pred_check
          %p241 = pneg %p40
        $region38: #{tpu_custom_call.1} parent=35 // pred_check_branch
          %243 = sbr.rel (%p241) target = $region40
        $region39: #{tpu_custom_call.1} parent=35 // pred_region
          %s244 = sand.u32 %s30, 1
          %s245 = scalar_lea.sflag [#allocation3], %s244
          %s246 = sand.u32 %s30, 1
          %s247 = smul.addr %s246, 8
          %s248 = scalar_lea.vmem [#allocation2], %s247
          %s250 = ssub.s32 128, 128
          %251 = vsyncadd %s245, %s250
          %s252 = smul.addr %s20, 128
          %s253 = scalar_lea.hbm %s0, %s252
          %s255 = sshll.u32 %s248, 4
          %s256 = int_to_ptr.vmem [resolvable:$true] %s255
          %258 = dma.hbm_to_vmem [thread:$0]  %s253, 128, %s256, %s245
        $region40: #{tpu_custom_call.1} parent=35 // pred_fallthru
          _
      $region36: #{tpu_custom_call.1} parent=5 // pred_fallthru
        _
      %p259 = scmp.le.s32.totalorder 1, %s20
      %p260 = scmp.lt.s32.totalorder %s20, 3
      %p261 = pnand %p259, %p260
      %p262 = pneg %p261
      // Predicated region
      $region41: #{tpu_custom_call.1} parent=5 // pred_check
        _
      $region42: #{tpu_custom_call.1} parent=5 // pred_check_branch
        %264 = sbr.rel (%p261) target = $region44
      $region43: #{tpu_custom_call.1} parent=5 // pred_region
        %s265 = ssub.s32 %s20, 1
        %s266 = sand.u32 %s33, 1
        %s267 = scalar_lea.sflag [#allocation3], %s266
        %s268 = sand.u32 %s33, 1
        %s269 = smul.addr %s268, 8
        %s270 = scalar_lea.vmem [#allocation2], %s269
        // Predicated region
        $region45: #{tpu_custom_call.1} parent=43 // pred_check
          %p271 = pneg %p46
        $region46: #{tpu_custom_call.1} parent=43 // pred_check_branch
          %273 = sbr.rel (%p271) target = $region48
        $region47: #{tpu_custom_call.1} parent=43 // pred_region
          %274 = dma.done %s267, 128
        $region48: #{tpu_custom_call.1} parent=43 // pred_fallthru
          _
        // Predicated region
        $region49: #{tpu_custom_call.1} parent=43 // pred_check
          %p275 = pneg %p67
        $region50: #{tpu_custom_call.1} parent=43 // pred_check_branch
          %277 = sbr.rel (%p275) target = $region52
        $region51: #{tpu_custom_call.1} parent=43 // pred_region
          %278 = dma.done [#allocation6], 2048
        $region52: #{tpu_custom_call.1} parent=43 // pred_fallthru
          _
        // Predicated region
        $region53: #{tpu_custom_call.1} parent=43 // pred_check
          %p279 = pneg %p109
        $region54: #{tpu_custom_call.1} parent=43 // pred_check_branch
          %281 = sbr.rel (%p279) target = $region56
        $region55: #{tpu_custom_call.1} parent=43 // pred_region
          %282 = dma.done [#allocation6], 2048
        $region56: #{tpu_custom_call.1} parent=43 // pred_fallthru
          _
        // Predicated region
        $region57: #{tpu_custom_call.1} parent=43 // pred_check
          %p283 = pneg %p151
        $region58: #{tpu_custom_call.1} parent=43 // pred_check_branch
          %285 = sbr.rel (%p283) target = $region60
        $region59: #{tpu_custom_call.1} parent=43 // pred_region
          %286 = dma.done [#allocation9], 2048
        $region60: #{tpu_custom_call.1} parent=43 // pred_fallthru
          _
        %s287 = sand.u32 %s33, 1
        %s288 = scalar_lea.sflag [#allocation3], %s287
        %s289 = sand.u32 %s33, 1
        %s290 = smul.addr %s289, 8
        %s291 = scalar_lea.vmem [#allocation2], %s290
        %p292 = pneg %p46
        %p293 = pneg %p43
        %p294 = pneg %p67
        %p295 = pneg %p64
        %p296 = pneg %p88
        %p297 = pneg %p85
        %p298 = pneg %p109
        %p299 = pneg %p106
        %p300 = pneg %p130
        %p301 = pneg %p127
        %p302 = pneg %p151
        %p303 = pneg %p148
        %p304 = pneg %p177
        %p305 = pneg %p174
        %s306 = sand.u32 %s164, 1
        %s307 = scalar_lea.sflag [#allocation4], %s306
        %s308 = sand.u32 %s164, 1
        %s309 = smul.addr %s308, 8
        %s310 = scalar_lea.vmem [#allocation10], %s309
        %v311 = vld [vmem:[%s270] sm:$0xff]
        %v312 = vmax.f32 %v311, 0.0
        %v313 = vld [vmem:[#allocation5] sm:$0xff]
        %v314 = vld [vmem:[#allocation5 + $0x8] sm:$0xff]
        %v315 = vld [vmem:[#allocation5 + $0x10] sm:$0xff]
        %v316 = vld [vmem:[#allocation5 + $0x18] sm:$0xff]
        %v317 = vld [vmem:[#allocation5 + $0x20] sm:$0xff]
        %v318 = vld [vmem:[#allocation5 + $0x28] sm:$0xff]
        %v319 = vld [vmem:[#allocation5 + $0x30] sm:$0xff]
        %v320 = vld [vmem:[#allocation5 + $0x38] sm:$0xff]
        %v321 = vld [vmem:[#allocation5 + $0x40] sm:$0xff]
        %v322 = vld [vmem:[#allocation5 + $0x48] sm:$0xff]
        %v323 = vld [vmem:[#allocation5 + $0x50] sm:$0xff]
        %v324 = vld [vmem:[#allocation5 + $0x58] sm:$0xff]
        %v325 = vld [vmem:[#allocation5 + $0x60] sm:$0xff]
        %v326 = vld [vmem:[#allocation5 + $0x68] sm:$0xff]
        %v327 = vld [vmem:[#allocation5 + $0x70] sm:$0xff]
        %v328 = vld [vmem:[#allocation5 + $0x78] sm:$0xff]
        %v329 = vld [vmem:[%s2] sm:$0x1]
        %v331 = vlaneseq
        %v332 = vshrl.u32 %v331, 7
        %v333 = vsub.s32 0, %v332
        %v334 = vrot.slane %v329, %v333
        %336 = vmatprep.subr.mxu0 0.0
        %337 = vmatpush1.msra.mxu0 %v313
        %338 = vmatprep.subr.mxu0 0.0
        %339 = vmatpush1.msra.mxu0 %v314
        %340 = vmatprep.subr.mxu0 0.0
        %341 = vmatpush1.msra.mxu0 %v315
        %342 = vmatprep.subr.mxu0 0.0
        %343 = vmatpush1.msra.mxu0 %v316
        %344 = vmatprep.subr.mxu0 0.0
        %345 = vmatpush1.msra.mxu0 %v317
        %346 = vmatprep.subr.mxu0 0.0
        %347 = vmatpush1.msra.mxu0 %v318
        %348 = vmatprep.subr.mxu0 0.0
        %349 = vmatpush1.msra.mxu0 %v319
        %350 = vmatprep.subr.mxu0 0.0
        %351 = vmatpush1.msra.mxu0 %v320
        %352 = vmatprep.subr.mxu0 0.0
        %353 = vmatpush1.msra.mxu0 %v321
        %354 = vmatprep.subr.mxu0 0.0
        %355 = vmatpush1.msra.mxu0 %v322
        %356 = vmatprep.subr.mxu0 0.0
        %357 = vmatpush1.msra.mxu0 %v323
        %358 = vmatprep.subr.mxu0 0.0
        %359 = vmatpush1.msra.mxu0 %v324
        %360 = vmatprep.subr.mxu0 0.0
        %361 = vmatpush1.msra.mxu0 %v325
        %362 = vmatprep.subr.mxu0 0.0
        %363 = vmatpush1.msra.mxu0 %v326
        %364 = vmatprep.subr.mxu0 0.0
        %365 = vmatpush1.msra.mxu0 %v327
        %366 = vmatprep.subr.mxu0 0.0
        %367 = vmatpush1.msra.mxu0 %v328
        %368 = vmatprep.subr.mxu0 0.0
        %369 = vmatpush1.msra.mxu0 0.0
        %370 = vmatprep.subr.mxu0 0.0
        %371 = vmatpush1.msra.mxu0 0.0
        %372 = vmatprep.subr.mxu0 0.0
        %373 = vmatpush1.msra.mxu0 0.0
        %374 = vmatprep.subr.mxu0 0.0
        %375 = vmatpush1.msra.mxu0 0.0
        %376 = vmatprep.subr.mxu0 0.0
        %377 = vmatpush1.msra.mxu0 0.0
        %378 = vmatprep.subr.mxu0 0.0
        %379 = vmatpush1.msra.mxu0 0.0
        %380 = vmatprep.subr.mxu0 0.0
        %381 = vmatpush1.msra.mxu0 0.0
        %382 = vmatprep.subr.mxu0 0.0
        %383 = vmatpush1.msra.mxu0 0.0
        %384 = vmatprep.subr.mxu0 0.0
        %385 = vmatpush1.msra.mxu0 0.0
        %386 = vmatprep.subr.mxu0 0.0
        %387 = vmatpush1.msra.mxu0 0.0
        %388 = vmatprep.subr.mxu0 0.0
        %389 = vmatpush1.msra.mxu0 0.0
        %390 = vmatprep.subr.mxu0 0.0
        %391 = vmatpush1.msra.mxu0 0.0
        %392 = vmatprep.subr.mxu0 0.0
        %393 = vmatpush1.msra.mxu0 0.0
        %394 = vmatprep.subr.mxu0 0.0
        %395 = vmatpush1.msra.mxu0 0.0
        %396 = vmatprep.subr.mxu0 0.0
        %397 = vmatpush1.msra.mxu0 0.0
        %398 = vmatprep.subr.mxu0 0.0
        %399 = vmatpush1.msra.mxu0 0.0
        %400 = vmatprep.mubr.f32.mxu0 0.0
        %401 = vmatmul.mubr.f32.gmra.mrb[0].mxu0 %v312
        %v402 = vpop.f32.mrb[0].mxu0
        %v403 = vadd.f32 %v334, %v402
        %v404 = vpop.f32.mrb[0].mxu0
        %405 = vdwg.mxu0
        %v406 = vmax.f32 %v403, 0.0
        %v407 = vld [vmem:[#allocation7] sm:$0xff]
        %v408 = vld [vmem:[#allocation7 + $0x8] sm:$0xff]
        %v409 = vld [vmem:[#allocation7 + $0x10] sm:$0xff]
        %v410 = vld [vmem:[#allocation7 + $0x18] sm:$0xff]
        %v411 = vld [vmem:[#allocation7 + $0x20] sm:$0xff]
        %v412 = vld [vmem:[#allocation7 + $0x28] sm:$0xff]
        %v413 = vld [vmem:[#allocation7 + $0x30] sm:$0xff]
        %v414 = vld [vmem:[#allocation7 + $0x38] sm:$0xff]
        %v415 = vld [vmem:[#allocation7 + $0x40] sm:$0xff]
        %v416 = vld [vmem:[#allocation7 + $0x48] sm:$0xff]
        %v417 = vld [vmem:[#allocation7 + $0x50] sm:$0xff]
        %v418 = vld [vmem:[#allocation7 + $0x58] sm:$0xff]
        %v419 = vld [vmem:[#allocation7 + $0x60] sm:$0xff]
        %v420 = vld [vmem:[#allocation7 + $0x68] sm:$0xff]
        %v421 = vld [vmem:[#allocation7 + $0x70] sm:$0xff]
        %v422 = vld [vmem:[#allocation7 + $0x78] sm:$0xff]
        %v423 = vld [vmem:[%s4] sm:$0x1]
        %v425 = vlaneseq
        %v426 = vshrl.u32 %v425, 7
        %v427 = vsub.s32 0, %v426
        %v428 = vrot.slane %v423, %v427
        %430 = vmatprep.subr.mxu0 0.0
        %431 = vmatpush1.msra.mxu0 %v407
        %432 = vmatprep.subr.mxu0 0.0
        %433 = vmatpush1.msra.mxu0 %v408
        %434 = vmatprep.subr.mxu0 0.0
        %435 = vmatpush1.msra.mxu0 %v409
        %436 = vmatprep.subr.mxu0 0.0
        %437 = vmatpush1.msra.mxu0 %v410
        %438 = vmatprep.subr.mxu0 0.0
        %439 = vmatpush1.msra.mxu0 %v411
        %440 = vmatprep.subr.mxu0 0.0
        %441 = vmatpush1.msra.mxu0 %v412
        %442 = vmatprep.subr.mxu0 0.0
        %443 = vmatpush1.msra.mxu0 %v413
        %444 = vmatprep.subr.mxu0 0.0
        %445 = vmatpush1.msra.mxu0 %v414
        %446 = vmatprep.subr.mxu0 0.0
        %447 = vmatpush1.msra.mxu0 %v415
        %448 = vmatprep.subr.mxu0 0.0
        %449 = vmatpush1.msra.mxu0 %v416
        %450 = vmatprep.subr.mxu0 0.0
        %451 = vmatpush1.msra.mxu0 %v417
        %452 = vmatprep.subr.mxu0 0.0
        %453 = vmatpush1.msra.mxu0 %v418
        %454 = vmatprep.subr.mxu0 0.0
        %455 = vmatpush1.msra.mxu0 %v419
        %456 = vmatprep.subr.mxu0 0.0
        %457 = vmatpush1.msra.mxu0 %v420
        %458 = vmatprep.subr.mxu0 0.0
        %459 = vmatpush1.msra.mxu0 %v421
        %460 = vmatprep.subr.mxu0 0.0
        %461 = vmatpush1.msra.mxu0 %v422
        %462 = vmatprep.subr.mxu0 0.0
        %463 = vmatpush1.msra.mxu0 0.0
        %464 = vmatprep.subr.mxu0 0.0
        %465 = vmatpush1.msra.mxu0 0.0
        %466 = vmatprep.subr.mxu0 0.0
        %467 = vmatpush1.msra.mxu0 0.0
        %468 = vmatprep.subr.mxu0 0.0
        %469 = vmatpush1.msra.mxu0 0.0
        %470 = vmatprep.subr.mxu0 0.0
        %471 = vmatpush1.msra.mxu0 0.0
        %472 = vmatprep.subr.mxu0 0.0
        %473 = vmatpush1.msra.mxu0 0.0
        %474 = vmatprep.subr.mxu0 0.0
        %475 = vmatpush1.msra.mxu0 0.0
        %476 = vmatprep.subr.mxu0 0.0
        %477 = vmatpush1.msra.mxu0 0.0
        %478 = vmatprep.subr.mxu0 0.0
        %479 = vmatpush1.msra.mxu0 0.0
        %480 = vmatprep.subr.mxu0 0.0
        %481 = vmatpush1.msra.mxu0 0.0
        %482 = vmatprep.subr.mxu0 0.0
        %483 = vmatpush1.msra.mxu0 0.0
        %484 = vmatprep.subr.mxu0 0.0
        %485 = vmatpush1.msra.mxu0 0.0
        %486 = vmatprep.subr.mxu0 0.0
        %487 = vmatpush1.msra.mxu0 0.0
        %488 = vmatprep.subr.mxu0 0.0
        %489 = vmatpush1.msra.mxu0 0.0
        %490 = vmatprep.subr.mxu0 0.0
        %491 = vmatpush1.msra.mxu0 0.0
        %492 = vmatprep.subr.mxu0 0.0
        %493 = vmatpush1.msra.mxu0 0.0
        %494 = vmatprep.mubr.f32.mxu0 0.0
        %495 = vmatmul.mubr.f32.gmra.mrb[0].mxu0 %v406
        %v496 = vpop.f32.mrb[0].mxu0
        %v497 = vadd.f32 %v428, %v496
        %v498 = vpop.f32.mrb[0].mxu0
        %499 = vdwg.mxu0
        %v500 = vld [vmem:[#allocation8] sm:$0xff]
        %v501 = vld [vmem:[#allocation8 + $0x8] sm:$0xff]
        %v502 = vld [vmem:[#allocation8 + $0x10] sm:$0xff]
        %v503 = vld [vmem:[#allocation8 + $0x18] sm:$0xff]
        %v504 = vld [vmem:[#allocation8 + $0x20] sm:$0xff]
        %v505 = vld [vmem:[#allocation8 + $0x28] sm:$0xff]
        %v506 = vld [vmem:[#allocation8 + $0x30] sm:$0xff]
        %v507 = vld [vmem:[#allocation8 + $0x38] sm:$0xff]
        %v508 = vld [vmem:[#allocation8 + $0x40] sm:$0xff]
        %v509 = vld [vmem:[#allocation8 + $0x48] sm:$0xff]
        %v510 = vld [vmem:[#allocation8 + $0x50] sm:$0xff]
        %v511 = vld [vmem:[#allocation8 + $0x58] sm:$0xff]
        %v512 = vld [vmem:[#allocation8 + $0x60] sm:$0xff]
        %v513 = vld [vmem:[#allocation8 + $0x68] sm:$0xff]
        %v514 = vld [vmem:[#allocation8 + $0x70] sm:$0xff]
        %v515 = vld [vmem:[#allocation8 + $0x78] sm:$0xff]
        %516 = vmatprep.subr.mxu0 0.0
        %517 = vmatpush1.msra.mxu0 %v500
        %518 = vmatprep.subr.mxu0 0.0
        %519 = vmatpush1.msra.mxu0 %v501
        %520 = vmatprep.subr.mxu0 0.0
        %521 = vmatpush1.msra.mxu0 %v502
        %522 = vmatprep.subr.mxu0 0.0
        %523 = vmatpush1.msra.mxu0 %v503
        %524 = vmatprep.subr.mxu0 0.0
        %525 = vmatpush1.msra.mxu0 %v504
        %526 = vmatprep.subr.mxu0 0.0
        %527 = vmatpush1.msra.mxu0 %v505
        %528 = vmatprep.subr.mxu0 0.0
        %529 = vmatpush1.msra.mxu0 %v506
        %530 = vmatprep.subr.mxu0 0.0
        %531 = vmatpush1.msra.mxu0 %v507
        %532 = vmatprep.subr.mxu0 0.0
        %533 = vmatpush1.msra.mxu0 %v508
        %534 = vmatprep.subr.mxu0 0.0
        %535 = vmatpush1.msra.mxu0 %v509
        %536 = vmatprep.subr.mxu0 0.0
        %537 = vmatpush1.msra.mxu0 %v510
        %538 = vmatprep.subr.mxu0 0.0
        %539 = vmatpush1.msra.mxu0 %v511
        %540 = vmatprep.subr.mxu0 0.0
        %541 = vmatpush1.msra.mxu0 %v512
        %542 = vmatprep.subr.mxu0 0.0
        %543 = vmatpush1.msra.mxu0 %v513
        %544 = vmatprep.subr.mxu0 0.0
        %545 = vmatpush1.msra.mxu0 %v514
        %546 = vmatprep.subr.mxu0 0.0
        %547 = vmatpush1.msra.mxu0 %v515
        %548 = vmatprep.subr.mxu0 0.0
        %549 = vmatpush1.msra.mxu0 0.0
        %550 = vmatprep.subr.mxu0 0.0
        %551 = vmatpush1.msra.mxu0 0.0
        %552 = vmatprep.subr.mxu0 0.0
        %553 = vmatpush1.msra.mxu0 0.0
        %554 = vmatprep.subr.mxu0 0.0
        %555 = vmatpush1.msra.mxu0 0.0
        %556 = vmatprep.subr.mxu0 0.0
        %557 = vmatpush1.msra.mxu0 0.0
        %558 = vmatprep.subr.mxu0 0.0
        %559 = vmatpush1.msra.mxu0 0.0
        %560 = vmatprep.subr.mxu0 0.0
        %561 = vmatpush1.msra.mxu0 0.0
        %562 = vmatprep.subr.mxu0 0.0
        %563 = vmatpush1.msra.mxu0 0.0
        %564 = vmatprep.subr.mxu0 0.0
        %565 = vmatpush1.msra.mxu0 0.0
        %566 = vmatprep.subr.mxu0 0.0
        %567 = vmatpush1.msra.mxu0 0.0
        %568 = vmatprep.subr.mxu0 0.0
        %569 = vmatpush1.msra.mxu0 0.0
        %570 = vmatprep.subr.mxu0 0.0
        %571 = vmatpush1.msra.mxu0 0.0
        %572 = vmatprep.subr.mxu0 0.0
        %573 = vmatpush1.msra.mxu0 0.0
        %574 = vmatprep.subr.mxu0 0.0
        %575 = vmatpush1.msra.mxu0 0.0
        %576 = vmatprep.subr.mxu0 0.0
        %577 = vmatpush1.msra.mxu0 0.0
        %578 = vmatprep.subr.mxu0 0.0
        %579 = vmatpush1.msra.mxu0 0.0
        %580 = vmatprep.mubr.f32.mxu0 0.0
        %581 = vmatmul.mubr.f32.gmra.mrb[0].mxu0 %v311
        %v582 = vpop.f32.mrb[0].mxu0
        %v583 = vadd.f32 %v497, %v582
        %v584 = vpop.f32.mrb[0].mxu0
        %585 = vdwg.mxu0
        %v586 = vmul.f32 %v583, 0.2
        %v587 = vmax.f32 %v583, %v586
        %588 = vst [vmem:[%s310] sm:$0xff] %v587
        %s589 = sand.u32 %s164, 1
        %s590 = scalar_lea.sflag [#allocation4], %s589
        %s591 = sand.u32 %s164, 1
        %s592 = smul.addr %s591, 8
        %s593 = scalar_lea.vmem [#allocation10], %s592
        // Predicated region
        $region61: #{tpu_custom_call.1} parent=43 // pred_check
          %p594 = pneg %p174
        $region62: #{tpu_custom_call.1} parent=43 // pred_check_branch
          %596 = sbr.rel (%p594) target = $region64
        $region63: #{tpu_custom_call.1} parent=43 // pred_region
          %s598 = ssub.s32 128, 128
          %599 = vsyncadd %s590, %s598
          %s600 = smul.addr %s25, 128
          %s601 = scalar_lea.hbm %s6, %s600
          %s603 = sshll.u32 %s593, 4
          %s604 = int_to_ptr.vmem [resolvable:$true] %s603
          %606 = dma.vmem_to_hbm [thread:$0]  %s604, 128, %s601, %s590
        $region64: #{tpu_custom_call.1} parent=43 // pred_fallthru
          _
      $region44: #{tpu_custom_call.1} parent=5 // pred_fallthru
        _
      %p607 = scmp.le.s32.totalorder 2, %s20
      // Predicated region
      $region65: #{tpu_custom_call.1} parent=5 // pred_check
        %p608 = pneg %p607
      $region66: #{tpu_custom_call.1} parent=5 // pred_check_branch
        %610 = sbr.rel (%p608) target = $region68
      $region67: #{tpu_custom_call.1} parent=5 // pred_region
        %s611 = ssub.s32 %s20, 2
        // Predicated region
        $region69: #{tpu_custom_call.1} parent=67 // pred_check
          %p612 = pneg %p180
        $region70: #{tpu_custom_call.1} parent=67 // pred_check_branch
          %614 = sbr.rel (%p612) target = $region72
        $region71: #{tpu_custom_call.1} parent=67 // pred_region
          %s615 = sand.u32 %s165, 1
          %s616 = scalar_lea.sflag [#allocation4], %s615
          %s617 = sand.u32 %s165, 1
          %s618 = smul.addr %s617, 8
          %s619 = scalar_lea.vmem [#allocation10], %s618
          %620 = dma.done %s616, 128
        $region72: #{tpu_custom_call.1} parent=67 // pred_fallthru
          _
      $region68: #{tpu_custom_call.1} parent=5 // pred_fallthru
        _
    $region6: #{tpu_custom_call.1} parent=1 // loop_footer
      %s24 = sadd.s32 1, %s20
    $region7: #{tpu_custom_call.1} parent=1 // loop_footer_branch
      %19 = sbr.rel target = $region3
    $region8: #{tpu_custom_call.1} parent=1 // loop_exit
      _
    %621 = vsyncpa [#allocation3], 1
    %s622 = scalar_lea.sflag [#allocation3], 1
    %623 = vsyncpa %s622, 1
    %624 = vsyncpa [#allocation6], 1
    %625 = vsyncpa [#allocation9], 1
    %626 = vsyncpa [#allocation4], 1
    %s627 = scalar_lea.sflag [#allocation4], 1
    %628 = vsyncpa %s627, 1

// kernel: tpu_custom_call.1
$region0: #{tpu_custom_call.1}
  #allocation0 [shape = 'u32[]', space=smem, size = 0x4, offset = 0x4, fixed_abs, tag = 'smem constant byte address 0x4 - core index']
  #allocation1 [shape = 'u32[144,128]{1,0:T(1,128)}', space=vmem, size = 0x12000, scoped, tag = 'internal scratch']
  %s0 = inlined_call_operand.hbm [shape: f32[16,128], index: 0, kind: input, shape index: {}]
  %s1 = inlined_call_operand.hbm [shape: f32[128,128], index: 1, kind: input, shape index: {}]
  %s2 = inlined_call_operand.vmem [shape: f32[1,128], index: 2, kind: input, shape index: {}]
  %s3 = inlined_call_operand.hbm [shape: f32[128,128], index: 3, kind: input, shape index: {}]
  %s4 = inlined_call_operand.vmem [shape: f32[1,128], index: 4, kind: input, shape index: {}]
  %s5 = inlined_call_operand.hbm [shape: f32[128,128], index: 5, kind: input, shape index: {}]
  %s6 = inlined_call_operand.hbm [shape: f32[16,128], index: 6, kind: output, shape index: {}]
  %s7 = sld [smem:[#allocation0]]
  $region73: #{tpu_custom_call.1} parent=0
    _
  %s9 = ssub.s32 1, %s7
  %s10 = scalar_select 0, %s9, %s7
  $region1: #{tpu_custom_call.1} parent=0
    #allocation2 [shape = 'u8[8192]{0}', space=vmem, size = 0x2000, scoped, tag = 'input window, operand 0']
    #allocation3 [shape = 's32[2]{0}', space=sflag, size = 0x8, scoped, tag = 'scoped memory for tpu_custom_call.1']
    #allocation4 [shape = 's32[2]{0}', space=sflag, size = 0x8, scoped, tag = 'scoped memory for tpu_custom_call.1']
    #allocation5 [shape = 'u8[65536]{0}', space=vmem, size = 0x10000, scoped, tag = 'input window, operand 1, single buffered']
    #allocation6 [shape = 's32[1]{0}', space=sflag, size = 0x4, scoped, tag = 'scoped memory for tpu_custom_call.1']
    #allocation7 [shape = 'u8[65536]{0}', space=vmem, size = 0x10000, scoped, tag = 'input window, operand 3, single buffered']
    #allocation8 [shape = 'u8[65536]{0}', space=vmem, size = 0x10000, scoped, tag = 'input window, operand 5, single buffered']
    #allocation9 [shape = 's32[1]{0}', space=sflag, size = 0x4, scoped, tag = 'scoped memory for tpu_custom_call.1']
    #allocation10 [shape = 'u8[8192]{0}', space=vmem, size = 0x2000, scoped, tag = 'output window, operand 0']
    %11 = vsyncpa [#allocation3], 0
    %s12 = scalar_lea.sflag [#allocation3], 1
    %13 = vsyncpa %s12, 0
    %14 = vsyncpa [#allocation6], 0
    %15 = vsyncpa [#allocation9], 0
    %16 = vsyncpa [#allocation4], 0
    %s17 = scalar_lea.sflag [#allocation4], 1
    %18 = vsyncpa %s17, 0
    loop: start=0, step=1, limit=4
    $region2: #{tpu_custom_call.1} parent=1 // loop_pre_header
      _
    $region3: #{tpu_custom_call.1} parent=1 // loop_header
      %s20 = sphi 0, %s24
      %p21 = scmp.ge.s32.totalorder %s20, 4
      %s30 = sphi 0, %s32
      %s33 = sphi 0, %s30
      %s34 = sphi 0, %s33
      %s50 = sphi 0, %s34
      %s54 = sphi 0, %s54
      %s56 = sphi 0, %s54
      %s57 = sphi 0, %s56
      %s71 = sphi 0, %s57
      %s75 = sphi 0, %s75
      %s77 = sphi 0, %s75
      %s78 = sphi 0, %s77
      %s92 = sphi 0, %s78
      %s96 = sphi 0, %s96
      %s98 = sphi 0, %s96
      %s99 = sphi 0, %s98
      %s113 = sphi 0, %s99
      %s117 = sphi 0, %s117
      %s119 = sphi 0, %s117
      %s120 = sphi 0, %s119
      %s134 = sphi 0, %s120
      %s138 = sphi 0, %s138
      %s140 = sphi 0, %s138
      %s141 = sphi 0, %s140
      %s155 = sphi 0, %s141
      %s161 = sphi 0, %s163
      %s164 = sphi 0, %s161
      %s165 = sphi 0, %s164
      %s181 = sphi 0, %s165
    $region4: #{tpu_custom_call.1} parent=1 // loop_header_branch
      %23 = sbr.rel (%p21) target = $region8
    $region5: #{tpu_custom_call.1} parent=1 // loop_body
      %s25 = ssub.s32 %s20, 1
      %s26 = ssub.s32 %s20, 2
      %s27 = sadd.s32 %s20, 1
      %s28 = ssub.s32 %s20, %s27
      %p29 = scmp.eq.s32.totalorder %s28, 0
      %s31 = sadd.s32 %s30, 1
      %s32 = scalar_select %p29, %s30, %s31
      %p35 = pneg %p29
      %p36 = scmp.eq.s32.totalorder %s20, 1
      %p37 = por %p35, %p36
      %p38 = scmp.ne.s32.totalorder %s30, %s33
      %p39 = scmp.eq.s32.totalorder %s20, 0
      %p40 = por %p38, %p39
      %p41 = scmp.ne.s32.totalorder %s30, %s33
      %p42 = scmp.eq.s32.totalorder %s25, 1
      %p43 = por %p41, %p42
      %p44 = scmp.ne.s32.totalorder %s33, %s34
      %p45 = scmp.eq.s32.totalorder %s25, 0
      %p46 = por %p44, %p45
      %p47 = scmp.ne.s32.totalorder %s33, %s34
      %p48 = scmp.eq.s32.totalorder %s26, 1
      %p49 = por %p47, %p48
      %p51 = scmp.ne.s32.totalorder %s34, %s50
      %p52 = scmp.eq.s32.totalorder %s26, 0
      %p53 = por %p51, %p52
      %s55 = sadd.s32 %s54, 1
      %p58 = scmp.eq.s32.totalorder %s20, 1
      %p59 = scmp.ne.s32.totalorder %s54, %s56
      %p60 = scmp.eq.s32.totalorder %s20, 0
      %p61 = por %p59, %p60
      %p62 = scmp.ne.s32.totalorder %s54, %s56
      %p63 = scmp.eq.s32.totalorder %s25, 1
      %p64 = por %p62, %p63
      %p65 = scmp.ne.s32.totalorder %s56, %s57
      %p66 = scmp.eq.s32.totalorder %s25, 0
      %p67 = por %p65, %p66
      %p68 = scmp.ne.s32.totalorder %s56, %s57
      %p69 = scmp.eq.s32.totalorder %s26, 1
      %p70 = por %p68, %p69
      %p72 = scmp.ne.s32.totalorder %s57, %s71
      %p73 = scmp.eq.s32.totalorder %s26, 0
      %p74 = por %p72, %p73
      %s76 = sadd.s32 %s75, 1
      %p79 = scmp.eq.s32.totalorder %s20, 1
      %p80 = scmp.ne.s32.totalorder %s75, %s77
      %p81 = scmp.eq.s32.totalorder %s20, 0
      %p82 = por %p80, %p81
      %p83 = scmp.ne.s32.totalorder %s75, %s77
      %p84 = scmp.eq.s32.totalorder %s25, 1
      %p85 = por %p83, %p84
      %p86 = scmp.ne.s32.totalorder %s77, %s78
      %p87 = scmp.eq.s32.totalorder %s25, 0
      %p88 = por %p86, %p87
      %p89 = scmp.ne.s32.totalorder %s77, %s78
      %p90 = scmp.eq.s32.totalorder %s26, 1
      %p91 = por %p89, %p90
      %p93 = scmp.ne.s32.totalorder %s78, %s92
      %p94 = scmp.eq.s32.totalorder %s26, 0
      %p95 = por %p93, %p94
      %s97 = sadd.s32 %s96, 1
      %p100 = scmp.eq.s32.totalorder %s20, 1
      %p101 = scmp.ne.s32.totalorder %s96, %s98
      %p102 = scmp.eq.s32.totalorder %s20, 0
      %p103 = por %p101, %p102
      %p104 = scmp.ne.s32.totalorder %s96, %s98
      %p105 = scmp.eq.s32.totalorder %s25, 1
      %p106 = por %p104, %p105
      %p107 = scmp.ne.s32.totalorder %s98, %s99
      %p108 = scmp.eq.s32.totalorder %s25, 0
      %p109 = por %p107, %p108
      %p110 = scmp.ne.s32.totalorder %s98, %s99
      %p111 = scmp.eq.s32.totalorder %s26, 1
      %p112 = por %p110, %p111
      %p114 = scmp.ne.s32.totalorder %s99, %s113
      %p115 = scmp.eq.s32.totalorder %s26, 0
      %p116 = por %p114, %p115
      %s118 = sadd.s32 %s117, 1
      %p121 = scmp.eq.s32.totalorder %s20, 1
      %p122 = scmp.ne.s32.totalorder %s117, %s119
      %p123 = scmp.eq.s32.totalorder %s20, 0
      %p124 = por %p122, %p123
      %p125 = scmp.ne.s32.totalorder %s117, %s119
      %p126 = scmp.eq.s32.totalorder %s25, 1
      %p127 = por %p125, %p126
      %p128 = scmp.ne.s32.totalorder %s119, %s120
      %p129 = scmp.eq.s32.totalorder %s25, 0
      %p130 = por %p128, %p129
      %p131 = scmp.ne.s32.totalorder %s119, %s120
      %p132 = scmp.eq.s32.totalorder %s26, 1
      %p133 = por %p131, %p132
      %p135 = scmp.ne.s32.totalorder %s120, %s134
      %p136 = scmp.eq.s32.totalorder %s26, 0
      %p137 = por %p135, %p136
      %s139 = sadd.s32 %s138, 1
      %p142 = scmp.eq.s32.totalorder %s20, 1
      %p143 = scmp.ne.s32.totalorder %s138, %s140
      %p144 = scmp.eq.s32.totalorder %s20, 0
      %p145 = por %p143, %p144
      %p146 = scmp.ne.s32.totalorder %s138, %s140
      %p147 = scmp.eq.s32.totalorder %s25, 1
      %p148 = por %p146, %p147
      %p149 = scmp.ne.s32.totalorder %s140, %s141
      %p150 = scmp.eq.s32.totalorder %s25, 0
      %p151 = por %p149, %p150
      %p152 = scmp.ne.s32.totalorder %s140, %s141
      %p153 = scmp.eq.s32.totalorder %s26, 1
      %p154 = por %p152, %p153
      %p156 = scmp.ne.s32.totalorder %s141, %s155
      %p157 = scmp.eq.s32.totalorder %s26, 0
      %p158 = por %p156, %p157
      %s159 = ssub.s32 %s20, %s27
      %p160 = scmp.eq.s32.totalorder %s159, 0
      %s162 = sadd.s32 %s161, 1
      %s163 = scalar_select %p160, %s161, %s162
      %p166 = pneg %p160
      %p167 = scmp.eq.s32.totalorder %s20, 1
      %p168 = por %p166, %p167
      %p169 = scmp.ne.s32.totalorder %s161, %s164
      %p170 = scmp.eq.s32.totalorder %s20, 0
      %p171 = por %p169, %p170
      %p172 = scmp.ne.s32.totalorder %s161, %s164
      %p173 = scmp.eq.s32.totalorder %s25, 1
      %p174 = por %p172, %p173
      %p175 = scmp.ne.s32.totalorder %s164, %s165
      %p176 = scmp.eq.s32.totalorder %s25, 0
      %p177 = por %p175, %p176
      %p178 = scmp.ne.s32.totalorder %s164, %s165
      %p179 = scmp.eq.s32.totalorder %s26, 1
      %p180 = por %p178, %p179
      %p182 = scmp.ne.s32.totalorder %s165, %s181
      %p183 = scmp.eq.s32.totalorder %s26, 0
      %p184 = por %p182, %p183
      %p185 = scmp.le.s32.totalorder 1, %s20
      %p186 = scmp.lt.s32.totalorder %s20, 3
      %p187 = pnand %p185, %p186
      %p188 = pneg %p187
      // Predicated region
      $region9: #{tpu_custom_call.1} parent=5 // pred_check
        _
      $region10: #{tpu_custom_call.1} parent=5 // pred_check_branch
        %190 = sbr.rel (%p187) target = $region12
      $region11: #{tpu_custom_call.1} parent=5 // pred_region
        %s191 = ssub.s32 %s20, 1
        // Predicated region
        $region13: #{tpu_custom_call.1} parent=11 // pred_check
          %p192 = pneg %p67
        $region14: #{tpu_custom_call.1} parent=11 // pred_check_branch
          %194 = sbr.rel (%p192) target = $region16
        $region15: #{tpu_custom_call.1} parent=11 // pred_region
          %s196 = ssub.s32 2048, 2048
          %197 = vsyncadd [#allocation6], %s196
          %s198 = sshll.u32 [#allocation5], 4
          %s199 = int_to_ptr.vmem [resolvable:$true] %s198
          %204 = dma.hbm_to_vmem [thread:$0]  %s1, 2048, %s199, [#allocation6], 128, 128, 8
        $region16: #{tpu_custom_call.1} parent=11 // pred_fallthru
          _
        // Predicated region
        $region17: #{tpu_custom_call.1} parent=11 // pred_check
          %p205 = pneg %p88
        $region18: #{tpu_custom_call.1} parent=11 // pred_check_branch
          %207 = sbr.rel (%p205) target = $region20
        $region19: #{tpu_custom_call.1} parent=11 // pred_region
          _
        $region20: #{tpu_custom_call.1} parent=11 // pred_fallthru
          _
        // Predicated region
        $region21: #{tpu_custom_call.1} parent=11 // pred_check
          %p208 = pneg %p109
        $region22: #{tpu_custom_call.1} parent=11 // pred_check_branch
          %210 = sbr.rel (%p208) target = $region24
        $region23: #{tpu_custom_call.1} parent=11 // pred_region
          %s212 = ssub.s32 2048, 2048
          %213 = vsyncadd [#allocation6], %s212
          %s214 = sshll.u32 [#allocation7], 4
          %s215 = int_to_ptr.vmem [resolvable:$true] %s214
          %220 = dma.hbm_to_vmem [thread:$0]  %s3, 2048, %s215, [#allocation6], 128, 128, 8
        $region24: #{tpu_custom_call.1} parent=11 // pred_fallthru
          _
        // Predicated region
        $region25: #{tpu_custom_call.1} parent=11 // pred_check
          %p221 = pneg %p130
        $region26: #{tpu_custom_call.1} parent=11 // pred_check_branch
          %223 = sbr.rel (%p221) target = $region28
        $region27: #{tpu_custom_call.1} parent=11 // pred_region
          _
        $region28: #{tpu_custom_call.1} parent=11 // pred_fallthru
          _
        // Predicated region
        $region29: #{tpu_custom_call.1} parent=11 // pred_check
          %p224 = pneg %p151
        $region30: #{tpu_custom_call.1} parent=11 // pred_check_branch
          %226 = sbr.rel (%p224) target = $region32
        $region31: #{tpu_custom_call.1} parent=11 // pred_region
          %s228 = ssub.s32 2048, 2048
          %229 = vsyncadd [#allocation9], %s228
          %s230 = sshll.u32 [#allocation8], 4
          %s231 = int_to_ptr.vmem [resolvable:$true] %s230
          %236 = dma.hbm_to_vmem [thread:$0]  %s5, 2048, %s231, [#allocation9], 128, 128, 8
        $region32: #{tpu_custom_call.1} parent=11 // pred_fallthru
          _
      $region12: #{tpu_custom_call.1} parent=5 // pred_fallthru
        _
      %p237 = scmp.lt.s32.totalorder %s20, 2
      // Predicated region
      $region33: #{tpu_custom_call.1} parent=5 // pred_check
        %p238 = pneg %p237
      $region34: #{tpu_custom_call.1} parent=5 // pred_check_branch
        %240 = sbr.rel (%p238) target = $region36
      $region35: #{tpu_custom_call.1} parent=5 // pred_region
        // Predicated region
        $region37: #{tpu_custom_call.1} parent=35 // pred_check
          %p241 = pneg %p40
        $region38: #{tpu_custom_call.1} parent=35 // pred_check_branch
          %243 = sbr.rel (%p241) target = $region40
        $region39: #{tpu_custom_call.1} parent=35 // pred_region
          %s244 = sand.u32 %s30, 1
          %s245 = scalar_lea.sflag [#allocation3], %s244
          %s246 = sand.u32 %s30, 1
          %s247 = smul.addr %s246, 8
          %s248 = scalar_lea.vmem [#allocation2], %s247
          %s250 = ssub.s32 128, 128
          %251 = vsyncadd %s245, %s250
          %s252 = smul.addr %s20, 128
          %s253 = scalar_lea.hbm %s0, %s252
          %s255 = sshll.u32 %s248, 4
          %s256 = int_to_ptr.vmem [resolvable:$true] %s255
          %258 = dma.hbm_to_vmem [thread:$0]  %s253, 128, %s256, %s245
        $region40: #{tpu_custom_call.1} parent=35 // pred_fallthru
          _
      $region36: #{tpu_custom_call.1} parent=5 // pred_fallthru
        _
      %p259 = scmp.le.s32.totalorder 1, %s20
      %p260 = scmp.lt.s32.totalorder %s20, 3
      %p261 = pnand %p259, %p260
      %p262 = pneg %p261
      // Predicated region
      $region41: #{tpu_custom_call.1} parent=5 // pred_check
        _
      $region42: #{tpu_custom_call.1} parent=5 // pred_check_branch
        %264 = sbr.rel (%p261) target = $region44
      $region43: #{tpu_custom_call.1} parent=5 // pred_region
        %s265 = ssub.s32 %s20, 1
        %s266 = sand.u32 %s33, 1
        %s267 = scalar_lea.sflag [#allocation3], %s266
        %s268 = sand.u32 %s33, 1
        %s269 = smul.addr %s268, 8
        %s270 = scalar_lea.vmem [#allocation2], %s269
        // Predicated region
        $region45: #{tpu_custom_call.1} parent=43 // pred_check
          %p271 = pneg %p46
        $region46: #{tpu_custom_call.1} parent=43 // pred_check_branch
          %273 = sbr.rel (%p271) target = $region48
        $region47: #{tpu_custom_call.1} parent=43 // pred_region
          %274 = dma.done %s267, 128
        $region48: #{tpu_custom_call.1} parent=43 // pred_fallthru
          _
        // Predicated region
        $region49: #{tpu_custom_call.1} parent=43 // pred_check
          %p275 = pneg %p67
        $region50: #{tpu_custom_call.1} parent=43 // pred_check_branch
          %277 = sbr.rel (%p275) target = $region52
        $region51: #{tpu_custom_call.1} parent=43 // pred_region
          %278 = dma.done [#allocation6], 2048
        $region52: #{tpu_custom_call.1} parent=43 // pred_fallthru
          _
        // Predicated region
        $region53: #{tpu_custom_call.1} parent=43 // pred_check
          %p279 = pneg %p109
        $region54: #{tpu_custom_call.1} parent=43 // pred_check_branch
          %281 = sbr.rel (%p279) target = $region56
        $region55: #{tpu_custom_call.1} parent=43 // pred_region
          %282 = dma.done [#allocation6], 2048
        $region56: #{tpu_custom_call.1} parent=43 // pred_fallthru
          _
        // Predicated region
        $region57: #{tpu_custom_call.1} parent=43 // pred_check
          %p283 = pneg %p151
        $region58: #{tpu_custom_call.1} parent=43 // pred_check_branch
          %285 = sbr.rel (%p283) target = $region60
        $region59: #{tpu_custom_call.1} parent=43 // pred_region
          %286 = dma.done [#allocation9], 2048
        $region60: #{tpu_custom_call.1} parent=43 // pred_fallthru
          _
        %s287 = sand.u32 %s33, 1
        %s288 = scalar_lea.sflag [#allocation3], %s287
        %s289 = sand.u32 %s33, 1
        %s290 = smul.addr %s289, 8
        %s291 = scalar_lea.vmem [#allocation2], %s290
        %p292 = pneg %p46
        %p293 = pneg %p43
        %p294 = pneg %p67
        %p295 = pneg %p64
        %p296 = pneg %p88
        %p297 = pneg %p85
        %p298 = pneg %p109
        %p299 = pneg %p106
        %p300 = pneg %p130
        %p301 = pneg %p127
        %p302 = pneg %p151
        %p303 = pneg %p148
        %p304 = pneg %p177
        %p305 = pneg %p174
        %s306 = sand.u32 %s164, 1
        %s307 = scalar_lea.sflag [#allocation4], %s306
        %s308 = sand.u32 %s164, 1
        %s309 = smul.addr %s308, 8
        %s310 = scalar_lea.vmem [#allocation10], %s309
        %v311 = vld [vmem:[%s270] sm:$0xff]
        %v312 = vmax.f32 %v311, 0.0
        %v313 = vld [vmem:[#allocation5] sm:$0xff]
        %v314 = vld [vmem:[#allocation5 + $0x8] sm:$0xff]
        %v315 = vld [vmem:[#allocation5 + $0x10] sm:$0xff]
        %v316 = vld [vmem:[#allocation5 + $0x18] sm:$0xff]
        %v317 = vld [vmem:[#allocation5 + $0x20] sm:$0xff]
        %v318 = vld [vmem:[#allocation5 + $0x28] sm:$0xff]
        %v319 = vld [vmem:[#allocation5 + $0x30] sm:$0xff]
        %v320 = vld [vmem:[#allocation5 + $0x38] sm:$0xff]
        %v321 = vld [vmem:[#allocation5 + $0x40] sm:$0xff]
        %v322 = vld [vmem:[#allocation5 + $0x48] sm:$0xff]
        %v323 = vld [vmem:[#allocation5 + $0x50] sm:$0xff]
        %v324 = vld [vmem:[#allocation5 + $0x58] sm:$0xff]
        %v325 = vld [vmem:[#allocation5 + $0x60] sm:$0xff]
        %v326 = vld [vmem:[#allocation5 + $0x68] sm:$0xff]
        %v327 = vld [vmem:[#allocation5 + $0x70] sm:$0xff]
        %v328 = vld [vmem:[#allocation5 + $0x78] sm:$0xff]
        %v329 = vld [vmem:[%s2] sm:$0x1]
        %v331 = vlaneseq
        %v332 = vshrl.u32 %v331, 7
        %v333 = vsub.s32 0, %v332
        %v334 = vrot.slane %v329, %v333
        %336 = vmatprep.subr.mxu0 0.0
        %337 = vmatpush1.msra.mxu0 %v313
        %338 = vmatprep.subr.mxu0 0.0
        %339 = vmatpush1.msra.mxu0 %v314
        %340 = vmatprep.subr.mxu0 0.0
        %341 = vmatpush1.msra.mxu0 %v315
        %342 = vmatprep.subr.mxu0 0.0
        %343 = vmatpush1.msra.mxu0 %v316
        %344 = vmatprep.subr.mxu0 0.0
        %345 = vmatpush1.msra.mxu0 %v317
        %346 = vmatprep.subr.mxu0 0.0
        %347 = vmatpush1.msra.mxu0 %v318
        %348 = vmatprep.subr.mxu0 0.0
        %349 = vmatpush1.msra.mxu0 %v319
        %350 = vmatprep.subr.mxu0 0.0
        %351 = vmatpush1.msra.mxu0 %v320
        %352 = vmatprep.subr.mxu0 0.0
        %353 = vmatpush1.msra.mxu0 %v321
        %354 = vmatprep.subr.mxu0 0.0
        %355 = vmatpush1.msra.mxu0 %v322
        %356 = vmatprep.subr.mxu0 0.0
        %357 = vmatpush1.msra.mxu0 %v323
        %358 = vmatprep.subr.mxu0 0.0
        %359 = vmatpush1.msra.mxu0 %v324
        %360 = vmatprep.subr.mxu0 0.0
        %361 = vmatpush1.msra.mxu0 %v325
        %362 = vmatprep.subr.mxu0 0.0
        %363 = vmatpush1.msra.mxu0 %v326
        %364 = vmatprep.subr.mxu0 0.0
        %365 = vmatpush1.msra.mxu0 %v327
        %366 = vmatprep.subr.mxu0 0.0
        %367 = vmatpush1.msra.mxu0 %v328
        %368 = vmatprep.subr.mxu0 0.0
        %369 = vmatpush1.msra.mxu0 0.0
        %370 = vmatprep.subr.mxu0 0.0
        %371 = vmatpush1.msra.mxu0 0.0
        %372 = vmatprep.subr.mxu0 0.0
        %373 = vmatpush1.msra.mxu0 0.0
        %374 = vmatprep.subr.mxu0 0.0
        %375 = vmatpush1.msra.mxu0 0.0
        %376 = vmatprep.subr.mxu0 0.0
        %377 = vmatpush1.msra.mxu0 0.0
        %378 = vmatprep.subr.mxu0 0.0
        %379 = vmatpush1.msra.mxu0 0.0
        %380 = vmatprep.subr.mxu0 0.0
        %381 = vmatpush1.msra.mxu0 0.0
        %382 = vmatprep.subr.mxu0 0.0
        %383 = vmatpush1.msra.mxu0 0.0
        %384 = vmatprep.subr.mxu0 0.0
        %385 = vmatpush1.msra.mxu0 0.0
        %386 = vmatprep.subr.mxu0 0.0
        %387 = vmatpush1.msra.mxu0 0.0
        %388 = vmatprep.subr.mxu0 0.0
        %389 = vmatpush1.msra.mxu0 0.0
        %390 = vmatprep.subr.mxu0 0.0
        %391 = vmatpush1.msra.mxu0 0.0
        %392 = vmatprep.subr.mxu0 0.0
        %393 = vmatpush1.msra.mxu0 0.0
        %394 = vmatprep.subr.mxu0 0.0
        %395 = vmatpush1.msra.mxu0 0.0
        %396 = vmatprep.subr.mxu0 0.0
        %397 = vmatpush1.msra.mxu0 0.0
        %398 = vmatprep.subr.mxu0 0.0
        %399 = vmatpush1.msra.mxu0 0.0
        %400 = vmatprep.mubr.f32.mxu0 0.0
        %401 = vmatmul.mubr.f32.gmra.mrb[0].mxu0 %v312
        %v402 = vpop.f32.mrb[0].mxu0
        %v403 = vadd.f32 %v334, %v402
        %v404 = vpop.f32.mrb[0].mxu0
        %405 = vdwg.mxu0
        %v406 = vmax.f32 %v403, 0.0
        %v407 = vld [vmem:[#allocation7] sm:$0xff]
        %v408 = vld [vmem:[#allocation7 + $0x8] sm:$0xff]
        %v409 = vld [vmem:[#allocation7 + $0x10] sm:$0xff]
        %v410 = vld [vmem:[#allocation7 + $0x18] sm:$0xff]
        %v411 = vld [vmem:[#allocation7 + $0x20] sm:$0xff]
        %v412 = vld [vmem:[#allocation7 + $0x28] sm:$0xff]
        %v413 = vld [vmem:[#allocation7 + $0x30] sm:$0xff]
        %v414 = vld [vmem:[#allocation7 + $0x38] sm:$0xff]
        %v415 = vld [vmem:[#allocation7 + $0x40] sm:$0xff]
        %v416 = vld [vmem:[#allocation7 + $0x48] sm:$0xff]
        %v417 = vld [vmem:[#allocation7 + $0x50] sm:$0xff]
        %v418 = vld [vmem:[#allocation7 + $0x58] sm:$0xff]
        %v419 = vld [vmem:[#allocation7 + $0x60] sm:$0xff]
        %v420 = vld [vmem:[#allocation7 + $0x68] sm:$0xff]
        %v421 = vld [vmem:[#allocation7 + $0x70] sm:$0xff]
        %v422 = vld [vmem:[#allocation7 + $0x78] sm:$0xff]
        %v423 = vld [vmem:[%s4] sm:$0x1]
        %v425 = vlaneseq
        %v426 = vshrl.u32 %v425, 7
        %v427 = vsub.s32 0, %v426
        %v428 = vrot.slane %v423, %v427
        %430 = vmatprep.subr.mxu0 0.0
        %431 = vmatpush1.msra.mxu0 %v407
        %432 = vmatprep.subr.mxu0 0.0
        %433 = vmatpush1.msra.mxu0 %v408
        %434 = vmatprep.subr.mxu0 0.0
        %435 = vmatpush1.msra.mxu0 %v409
        %436 = vmatprep.subr.mxu0 0.0
        %437 = vmatpush1.msra.mxu0 %v410
        %438 = vmatprep.subr.mxu0 0.0
        %439 = vmatpush1.msra.mxu0 %v411
        %440 = vmatprep.subr.mxu0 0.0
        %441 = vmatpush1.msra.mxu0 %v412
        %442 = vmatprep.subr.mxu0 0.0
        %443 = vmatpush1.msra.mxu0 %v413
        %444 = vmatprep.subr.mxu0 0.0
        %445 = vmatpush1.msra.mxu0 %v414
        %446 = vmatprep.subr.mxu0 0.0
        %447 = vmatpush1.msra.mxu0 %v415
        %448 = vmatprep.subr.mxu0 0.0
        %449 = vmatpush1.msra.mxu0 %v416
        %450 = vmatprep.subr.mxu0 0.0
        %451 = vmatpush1.msra.mxu0 %v417
        %452 = vmatprep.subr.mxu0 0.0
        %453 = vmatpush1.msra.mxu0 %v418
        %454 = vmatprep.subr.mxu0 0.0
        %455 = vmatpush1.msra.mxu0 %v419
        %456 = vmatprep.subr.mxu0 0.0
        %457 = vmatpush1.msra.mxu0 %v420
        %458 = vmatprep.subr.mxu0 0.0
        %459 = vmatpush1.msra.mxu0 %v421
        %460 = vmatprep.subr.mxu0 0.0
        %461 = vmatpush1.msra.mxu0 %v422
        %462 = vmatprep.subr.mxu0 0.0
        %463 = vmatpush1.msra.mxu0 0.0
        %464 = vmatprep.subr.mxu0 0.0
        %465 = vmatpush1.msra.mxu0 0.0
        %466 = vmatprep.subr.mxu0 0.0
        %467 = vmatpush1.msra.mxu0 0.0
        %468 = vmatprep.subr.mxu0 0.0
        %469 = vmatpush1.msra.mxu0 0.0
        %470 = vmatprep.subr.mxu0 0.0
        %471 = vmatpush1.msra.mxu0 0.0
        %472 = vmatprep.subr.mxu0 0.0
        %473 = vmatpush1.msra.mxu0 0.0
        %474 = vmatprep.subr.mxu0 0.0
        %475 = vmatpush1.msra.mxu0 0.0
        %476 = vmatprep.subr.mxu0 0.0
        %477 = vmatpush1.msra.mxu0 0.0
        %478 = vmatprep.subr.mxu0 0.0
        %479 = vmatpush1.msra.mxu0 0.0
        %480 = vmatprep.subr.mxu0 0.0
        %481 = vmatpush1.msra.mxu0 0.0
        %482 = vmatprep.subr.mxu0 0.0
        %483 = vmatpush1.msra.mxu0 0.0
        %484 = vmatprep.subr.mxu0 0.0
        %485 = vmatpush1.msra.mxu0 0.0
        %486 = vmatprep.subr.mxu0 0.0
        %487 = vmatpush1.msra.mxu0 0.0
        %488 = vmatprep.subr.mxu0 0.0
        %489 = vmatpush1.msra.mxu0 0.0
        %490 = vmatprep.subr.mxu0 0.0
        %491 = vmatpush1.msra.mxu0 0.0
        %492 = vmatprep.subr.mxu0 0.0
        %493 = vmatpush1.msra.mxu0 0.0
        %494 = vmatprep.mubr.f32.mxu0 0.0
        %495 = vmatmul.mubr.f32.gmra.mrb[0].mxu0 %v406
        %v496 = vpop.f32.mrb[0].mxu0
        %v497 = vadd.f32 %v428, %v496
        %v498 = vpop.f32.mrb[0].mxu0
        %499 = vdwg.mxu0
        %v500 = vld [vmem:[#allocation8] sm:$0xff]
        %v501 = vld [vmem:[#allocation8 + $0x8] sm:$0xff]
        %v502 = vld [vmem:[#allocation8 + $0x10] sm:$0xff]
        %v503 = vld [vmem:[#allocation8 + $0x18] sm:$0xff]
        %v504 = vld [vmem:[#allocation8 + $0x20] sm:$0xff]
        %v505 = vld [vmem:[#allocation8 + $0x28] sm:$0xff]
        %v506 = vld [vmem:[#allocation8 + $0x30] sm:$0xff]
        %v507 = vld [vmem:[#allocation8 + $0x38] sm:$0xff]
        %v508 = vld [vmem:[#allocation8 + $0x40] sm:$0xff]
        %v509 = vld [vmem:[#allocation8 + $0x48] sm:$0xff]
        %v510 = vld [vmem:[#allocation8 + $0x50] sm:$0xff]
        %v511 = vld [vmem:[#allocation8 + $0x58] sm:$0xff]
        %v512 = vld [vmem:[#allocation8 + $0x60] sm:$0xff]
        %v513 = vld [vmem:[#allocation8 + $0x68] sm:$0xff]
        %v514 = vld [vmem:[#allocation8 + $0x70] sm:$0xff]
        %v515 = vld [vmem:[#allocation8 + $0x78] sm:$0xff]
        %516 = vmatprep.subr.mxu0 0.0
        %517 = vmatpush1.msra.mxu0 %v500
        %518 = vmatprep.subr.mxu0 0.0
        %519 = vmatpush1.msra.mxu0 %v501
        %520 = vmatprep.subr.mxu0 0.0
        %521 = vmatpush1.msra.mxu0 %v502
        %522 = vmatprep.subr.mxu0 0.0
        %523 = vmatpush1.msra.mxu0 %v503
        %524 = vmatprep.subr.mxu0 0.0
        %525 = vmatpush1.msra.mxu0 %v504
        %526 = vmatprep.subr.mxu0 0.0
        %527 = vmatpush1.msra.mxu0 %v505
        %528 = vmatprep.subr.mxu0 0.0
        %529 = vmatpush1.msra.mxu0 %v506
        %530 = vmatprep.subr.mxu0 0.0
        %531 = vmatpush1.msra.mxu0 %v507
        %532 = vmatprep.subr.mxu0 0.0
        %533 = vmatpush1.msra.mxu0 %v508
        %534 = vmatprep.subr.mxu0 0.0
        %535 = vmatpush1.msra.mxu0 %v509
        %536 = vmatprep.subr.mxu0 0.0
        %537 = vmatpush1.msra.mxu0 %v510
        %538 = vmatprep.subr.mxu0 0.0
        %539 = vmatpush1.msra.mxu0 %v511
        %540 = vmatprep.subr.mxu0 0.0
        %541 = vmatpush1.msra.mxu0 %v512
        %542 = vmatprep.subr.mxu0 0.0
        %543 = vmatpush1.msra.mxu0 %v513
        %544 = vmatprep.subr.mxu0 0.0
        %545 = vmatpush1.msra.mxu0 %v514
        %546 = vmatprep.subr.mxu0 0.0
        %547 = vmatpush1.msra.mxu0 %v515
        %548 = vmatprep.subr.mxu0 0.0
        %549 = vmatpush1.msra.mxu0 0.0
        %550 = vmatprep.subr.mxu0 0.0
        %551 = vmatpush1.msra.mxu0 0.0
        %552 = vmatprep.subr.mxu0 0.0
        %553 = vmatpush1.msra.mxu0 0.0
        %554 = vmatprep.subr.mxu0 0.0
        %555 = vmatpush1.msra.mxu0 0.0
        %556 = vmatprep.subr.mxu0 0.0
        %557 = vmatpush1.msra.mxu0 0.0
        %558 = vmatprep.subr.mxu0 0.0
        %559 = vmatpush1.msra.mxu0 0.0
        %560 = vmatprep.subr.mxu0 0.0
        %561 = vmatpush1.msra.mxu0 0.0
        %562 = vmatprep.subr.mxu0 0.0
        %563 = vmatpush1.msra.mxu0 0.0
        %564 = vmatprep.subr.mxu0 0.0
        %565 = vmatpush1.msra.mxu0 0.0
        %566 = vmatprep.subr.mxu0 0.0
        %567 = vmatpush1.msra.mxu0 0.0
        %568 = vmatprep.subr.mxu0 0.0
        %569 = vmatpush1.msra.mxu0 0.0
        %570 = vmatprep.subr.mxu0 0.0
        %571 = vmatpush1.msra.mxu0 0.0
        %572 = vmatprep.subr.mxu0 0.0
        %573 = vmatpush1.msra.mxu0 0.0
        %574 = vmatprep.subr.mxu0 0.0
        %575 = vmatpush1.msra.mxu0 0.0
        %576 = vmatprep.subr.mxu0 0.0
        %577 = vmatpush1.msra.mxu0 0.0
        %578 = vmatprep.subr.mxu0 0.0
        %579 = vmatpush1.msra.mxu0 0.0
        %580 = vmatprep.mubr.f32.mxu0 0.0
        %581 = vmatmul.mubr.f32.gmra.mrb[0].mxu0 %v311
        %v582 = vpop.f32.mrb[0].mxu0
        %v583 = vadd.f32 %v497, %v582
        %v584 = vpop.f32.mrb[0].mxu0
        %585 = vdwg.mxu0
        %v586 = vmul.f32 %v583, 0.2
        %v587 = vmax.f32 %v583, %v586
        %588 = vst [vmem:[%s310] sm:$0xff] %v587
        %s589 = sand.u32 %s164, 1
        %s590 = scalar_lea.sflag [#allocation4], %s589
        %s591 = sand.u32 %s164, 1
        %s592 = smul.addr %s591, 8
        %s593 = scalar_lea.vmem [#allocation10], %s592
        // Predicated region
        $region61: #{tpu_custom_call.1} parent=43 // pred_check
          %p594 = pneg %p174
        $region62: #{tpu_custom_call.1} parent=43 // pred_check_branch
          %596 = sbr.rel (%p594) target = $region64
        $region63: #{tpu_custom_call.1} parent=43 // pred_region
          %s598 = ssub.s32 128, 128
          %599 = vsyncadd %s590, %s598
          %s600 = smul.addr %s25, 128
          %s601 = scalar_lea.hbm %s6, %s600
          %s603 = sshll.u32 %s593, 4
          %s604 = int_to_ptr.vmem [resolvable:$true] %s603
          %606 = dma.vmem_to_hbm [thread:$0]  %s604, 128, %s601, %s590
        $region64: #{tpu_custom_call.1} parent=43 // pred_fallthru
          _
      $region44: #{tpu_custom_call.1} parent=5 // pred_fallthru
        _
      %p607 = scmp.le.s32.totalorder 2, %s20
      // Predicated region
      $region65: #{tpu_custom_call.1} parent=5 // pred_check
        %p608 = pneg %p607
      $region66: #{tpu_custom_call.1} parent=5 // pred_check_branch
        %610 = sbr.rel (%p608) target = $region68
      $region67: #{tpu_custom_call.1} parent=5 // pred_region
        %s611 = ssub.s32 %s20, 2
        // Predicated region
        $region69: #{tpu_custom_call.1} parent=67 // pred_check
          %p612 = pneg %p180
        $region70: #{tpu_custom_call.1} parent=67 // pred_check_branch
          %614 = sbr.rel (%p612) target = $region72
        $region71: #{tpu_custom_call.1} parent=67 // pred_region
          %s615 = sand.u32 %s165, 1
          %s616 = scalar_lea.sflag [#allocation4], %s615
          %s617 = sand.u32 %s165, 1
          %s618 = smul.addr %s617, 8
          %s619 = scalar_lea.vmem [#allocation10], %s618
          %620 = dma.done %s616, 128
        $region72: #{tpu_custom_call.1} parent=67 // pred_fallthru
          _
      $region68: #{tpu_custom_call.1} parent=5 // pred_fallthru
        _
    $region6: #{tpu_custom_call.1} parent=1 // loop_footer
      %s24 = sadd.s32 1, %s20
    $region7: #{tpu_custom_call.1} parent=1 // loop_footer_branch
      %19 = sbr.rel target = $region3
    $region8: #{tpu_custom_call.1} parent=1 // loop_exit
      _
    %621 = vsyncpa [#allocation3], 1
    %s622 = scalar_lea.sflag [#allocation3], 1
    %623 = vsyncpa %s622, 1
    %624 = vsyncpa [#allocation6], 1
    %625 = vsyncpa [#allocation9], 1
    %626 = vsyncpa [#allocation4], 1
    %s627 = scalar_lea.sflag [#allocation4], 1
    %628 = vsyncpa %s627, 1

</llo_original>
